<compile_context>
chip_gen: v5e
topology: v5e:2x2
jax: 0.10.0
libtpu: 0.0.40
codegen_flags: <defaults>
</compile_context>

<pallas_src>
import functools
import math

import jax
import jax.numpy as jnp
from jax.experimental import pallas as pl
from jax.experimental.pallas import tpu as pltpu


# ----------------------------------------------------------------------------
# Fused per-(batch, layer) encoder kernel
# ----------------------------------------------------------------------------
def _encoder_layer_kernel(emb_ref, kv_ref, eg_ref, eb_ref,
                          wqkv_ref, bqkv_ref, wo_ref, bo_ref,
                          ln1g_ref, ln1b_ref, w1_ref, b1_ref,
                          w2_ref, b2_ref, ln2g_ref, ln2b_ref,
                          out_ref, x_ref,
                          *, heads, head_dim_p, d_true, eps, scale):
    l = pl.program_id(1)
    num_layers = pl.num_programs(1)
    S, Dp = x_ref.shape
    inv_d = 1.0 / d_true

    # Lane-validity mask for the padded hidden dimension (true D = d_true).
    lane_valid = jax.lax.broadcasted_iota(jnp.int32, (1, Dp), 1) < d_true

    def layernorm(v, g, b):
        # v's padded lanes are zero by construction; use the true-D denominator
        # and mask the centered values so the variance is exact.
        mean = jnp.sum(v, axis=-1, keepdims=True) * inv_d
        centered = jnp.where(lane_valid, v - mean, 0.0)
        var = jnp.sum(centered * centered, axis=-1, keepdims=True) * inv_d
        return centered * jax.lax.rsqrt(var + eps) * g + b

    # Layer 0: embedding LayerNorm into the carried VMEM activation slab.
    @pl.when(l == 0)
    def _():
        x_ref[...] = layernorm(emb_ref[0].astype(jnp.float32),
                               eg_ref[...], eb_ref[...])

    x = x_ref[...]                                            # (S, Dp), f32

    # Additive attention mask built in-kernel from the key-validity row.
    add_mask = jnp.where(kv_ref[0] > 0.5, 0.0, -1e9).astype(jnp.float32)  # (1, S)

    # ---- fused QKV projection: one (S, Dp) @ (Dp, 3*Dp) matmul ----
    qkv = jnp.dot(x, wqkv_ref[0], preferred_element_type=jnp.float32) + bqkv_ref[0]
    q = qkv[:, :Dp] * scale                                   # scale folded into q
    k = qkv[:, Dp:2 * Dp]
    v = qkv[:, 2 * Dp:]

    # ---- multi-head attention, heads batched into two einsums ----
    def split_heads(t):                                       # (S, Dp) -> (H, S, hd_p)
        return jnp.stack(
            [t[:, h * head_dim_p:(h + 1) * head_dim_p] for h in range(heads)],
            axis=0)

    qh, kh, vh = split_heads(q), split_heads(k), split_heads(v)
    s = jnp.einsum('hqd,hkd->hqk', qh, kh,
                   preferred_element_type=jnp.float32)        # (H, S, S)
    s = s + add_mask[None, :, :]
    s = s - jnp.max(s, axis=-1, keepdims=True)
    pw = jnp.exp(s)
    pw = pw * pl.reciprocal(jnp.sum(pw, axis=-1, keepdims=True), approx=True)
    ctx = jnp.einsum('hqk,hkd->hqd', pw, vh,
                     preferred_element_type=jnp.float32)      # (H, S, hd_p)
    ctx = jnp.concatenate([ctx[h] for h in range(heads)], axis=-1)  # (S, Dp)

    # ---- single output-projection matmul ----
    attn = jnp.dot(ctx, wo_ref[0], preferred_element_type=jnp.float32) + bo_ref[0]
    x = layernorm(attn + x, ln1g_ref[0], ln1b_ref[0])

    # ---- feed forward (tanh-approx GELU on VPU/EUP) ----
    ff = jnp.dot(x, w1_ref[0], preferred_element_type=jnp.float32) + b1_ref[0]
    ff = 0.5 * ff * (1.0 + jnp.tanh(
        0.7978845608028654 * (ff + 0.044715 * ff * ff * ff)))
    ff = jnp.dot(ff, w2_ref[0], preferred_element_type=jnp.float32) + b2_ref[0]
    x = layernorm(ff + x, ln2g_ref[0], ln2b_ref[0])

    x_ref[...] = x                                            # carry to next layer

    @pl.when(l == num_layers - 1)
    def _():
        out_ref[0] = x.astype(out_ref.dtype)


def encoder(emb, key_valid, p, cfg):
    """grid=(B, L) pallas_call; returns last_hidden_state (B, S, Dp) (lane-padded)."""
    B, S, Dp = emb.shape
    L = cfg.layers

    def per_batch(arr):
        zeros = (0,) * (arr.ndim - 1)
        return pl.BlockSpec((1,) + arr.shape[1:], lambda b, l: (b,) + zeros)

    def per_layer(arr):
        zeros = (0,) * (arr.ndim - 1)
        return pl.BlockSpec((1,) + arr.shape[1:], lambda b, l: (l,) + zeros)

    def broadcast(arr):
        zeros = (0,) * arr.ndim
        return pl.BlockSpec(arr.shape, lambda b, l: zeros)

    kern = functools.partial(
        _encoder_layer_kernel,
        heads=cfg.heads, head_dim_p=cfg.head_dim_p,
        d_true=cfg.hidden, eps=1e-12,
        scale=1.0 / math.sqrt(cfg.head_dim))

    weights = (p["wqkv"], p["bqkv"], p["wo"], p["bo"],
               p["ln1_g"], p["ln1_b"], p["w1"], p["b1"],
               p["w2"], p["b2"], p["ln2_g"], p["ln2_b"])

    return pl.pallas_call(
        kern,
        out_shape=jax.ShapeDtypeStruct((B, S, Dp), jnp.float32),
        grid=(B, L),
        in_specs=[per_batch(emb), per_batch(key_valid),
                  broadcast(p["emb_ln_g"]), broadcast(p["emb_ln_b"])]
                 + [per_layer(w) for w in weights],
        out_specs=pl.BlockSpec((1, S, Dp), lambda b, l: (b, 0, 0)),
        scratch_shapes=[pltpu.VMEM((S, Dp), jnp.float32)],
        compiler_params=pltpu.CompilerParams(
            dimension_semantics=("parallel", "arbitrary")),
    )(emb, key_valid, p["emb_ln_g"], p["emb_ln_b"], *weights)


# ----------------------------------------------------------------------------
# Model: synthetic encoder + classification head
# ----------------------------------------------------------------------------
class Config:
    vocab_size = 64
    max_position = 16
    type_vocab = 2
    hidden = 32             # true hidden size
    heads = 2
    head_dim = 16            # hidden // heads
    intermediate = 64        # true FFN size
    layers = 2
    output_classes = 2
    # lane-dense padded sizes
    hidden_p = 128
    head_dim_p = 64          # hidden_p // heads
    intermediate_p = 128


def init_params(cfg, seed=0):
    key = jax.random.PRNGKey(seed)
    D, I, L = cfg.hidden, cfg.intermediate, cfg.layers
    Dp, Ip = cfg.hidden_p, cfg.intermediate_p
    H, hd, hdp = cfg.heads, cfg.head_dim, cfg.head_dim_p
    assert H * hdp == Dp

    def nrm(k, shape, scale=0.02):
        return (scale * jax.random.normal(k, shape)).astype(jnp.float32)

    def pad_last(w, to):
        return jnp.pad(w, [(0, 0)] * (w.ndim - 1) + [(0, to - w.shape[-1])])

    def pad_axis(w, axis, to):
        pads = [(0, 0)] * w.ndim
        pads[axis] = (0, to - w.shape[axis])
        return jnp.pad(w, pads)

    def pad_head_cols(w):
        # (D, H*hd) -> (D, H*hdp): head h occupies lanes [h*hdp, h*hdp+hd)
        w = w.reshape(w.shape[0], H, hd)
        w = jnp.pad(w, ((0, 0), (0, 0), (0, hdp - hd)))
        return w.reshape(-1, H * hdp)

    def pad_head_rows(w):
        # (H*hd, Dout) -> (H*hdp, Dout), matching pad_head_cols' lane layout
        dout = w.shape[-1]
        w = w.reshape(H, hd, dout)
        w = jnp.pad(w, ((0, 0), (0, hdp - hd), (0, 0)))
        return w.reshape(H * hdp, dout)

    keys = iter(jax.random.split(key, 4 + 6 * L))

    gamma_p = pad_last(jnp.ones((D,), jnp.float32), Dp)   # ones real, zeros pad

    p = {
        "tok_emb": pad_last(nrm(next(keys), (cfg.vocab_size, D)), Dp),
        "pos_emb": pad_last(nrm(next(keys), (cfg.max_position, D)), Dp),
        "type_emb": pad_last(nrm(next(keys), (cfg.type_vocab, D)), Dp),
        "emb_ln_g": gamma_p.reshape(1, Dp),
        "emb_ln_b": jnp.zeros((1, Dp), jnp.float32),
        "cls_w": nrm(next(keys), (D, cfg.output_classes)),
        "cls_b": jnp.zeros((cfg.output_classes,), jnp.float32),
    }

    wqkv, wo, w1, w2 = [], [], [], []
    for _ in range(L):
        wq = pad_head_cols(nrm(next(keys), (D, D)))             # (D, Dp)
        wk = pad_head_cols(nrm(next(keys), (D, D)))
        wv = pad_head_cols(nrm(next(keys), (D, D)))
        wqkv.append(pad_axis(jnp.concatenate([wq, wk, wv], axis=1), 0, Dp))  # (Dp, 3Dp)
        wo.append(pad_last(pad_head_rows(nrm(next(keys), (D, D))), Dp))      # (Dp, Dp)
        w1.append(pad_axis(pad_last(nrm(next(keys), (D, I)), Ip), 0, Dp))    # (Dp, Ip)
        w2.append(pad_axis(pad_last(nrm(next(keys), (I, D)), Dp), 0, Ip))    # (Ip, Dp)

    p["wqkv"] = jnp.stack(wqkv)                                  # (L, Dp, 3Dp)
    p["bqkv"] = jnp.zeros((L, 1, 3 * Dp), jnp.float32)
    p["wo"] = jnp.stack(wo)                                      # (L, Dp, Dp)
    p["bo"] = jnp.zeros((L, 1, Dp), jnp.float32)
    p["ln1_g"] = jnp.tile(gamma_p.reshape(1, 1, Dp), (L, 1, 1))
    p["ln1_b"] = jnp.zeros((L, 1, Dp), jnp.float32)
    p["w1"] = jnp.stack(w1)                                      # (L, Dp, Ip)
    p["b1"] = jnp.zeros((L, 1, Ip), jnp.float32)
    p["w2"] = jnp.stack(w2)                                      # (L, Ip, Dp)
    p["b2"] = jnp.zeros((L, 1, Dp), jnp.float32)
    p["ln2_g"] = jnp.tile(gamma_p.reshape(1, 1, Dp), (L, 1, 1))
    p["ln2_b"] = jnp.zeros((L, 1, Dp), jnp.float32)
    return p


def forward(params, input_ids, attention_mask, cfg):
    B, S = input_ids.shape

    # --- embeddings (gathers are glue, kept in plain JAX; lane-padded to Dp) ---
    positions = jnp.arange(S)
    emb = (jnp.take(params["tok_emb"], input_ids, axis=0)
           + params["pos_emb"][positions][None, :, :]
           + params["type_emb"][0][None, None, :])               # (B, S, Dp)

    # Key-validity row per batch (mask itself is built inside the kernel).
    key_valid = attention_mask.astype(jnp.float32).reshape(B, 1, S)

    # --- fused encoder: ONE pallas_call, grid over (batch, layer) ---
    last_hidden_state = encoder(emb, key_valid, params, cfg)     # (B, S, Dp)

    # --- classifier head: ~128 FLOPs, plain JAX (not worth a kernel launch) ---
    h_cls = last_hidden_state[:, 0, :cfg.hidden]                 # (B, D) real lanes
    logits = h_cls @ params["cls_w"] + params["cls_b"]           # (B, classes)
    return logits


if __name__ == "__main__":
    cfg = Config()
    params = init_params(cfg, seed=0)

    key = jax.random.PRNGKey(0)
    k_ids, _ = jax.random.split(key)
    B, S = 2, 8
    input_ids = jax.random.randint(k_ids, (B, S), 0, cfg.vocab_size, dtype=jnp.int32)
    attention_mask = jnp.ones((B, S), dtype=jnp.int32)
    attention_mask = attention_mask.at[1, 6:].set(0)             # pad tail of sample 1

    fwd = jax.jit(lambda p, ids, m: forward(p, ids, m, cfg))
    logits = jax.block_until_ready(fwd(params, input_ids, attention_mask))

    assert logits.shape == (B, cfg.output_classes)
    assert bool(jnp.all(jnp.isfinite(logits)))
    print("KERNEL_OK")
</pallas_src>

<mosaic_0001>
module attributes {stable_mosaic.version = 11 : i64} {
  func.func @_encoder_layer_kernel(%arg0: i32, %arg1: i32, %arg2: memref<1x8x128xf32, #tpu.memory_space<vmem>>, %arg3: memref<1x1x8xf32, #tpu.memory_space<vmem>>, %arg4: memref<1x128xf32, #tpu.memory_space<vmem>>, %arg5: memref<1x128xf32, #tpu.memory_space<vmem>>, %arg6: memref<1x128x384xf32, #tpu.memory_space<vmem>>, %arg7: memref<1x1x384xf32, #tpu.memory_space<vmem>>, %arg8: memref<1x128x128xf32, #tpu.memory_space<vmem>>, %arg9: memref<1x1x128xf32, #tpu.memory_space<vmem>>, %arg10: memref<1x1x128xf32, #tpu.memory_space<vmem>>, %arg11: memref<1x1x128xf32, #tpu.memory_space<vmem>>, %arg12: memref<1x128x128xf32, #tpu.memory_space<vmem>>, %arg13: memref<1x1x128xf32, #tpu.memory_space<vmem>>, %arg14: memref<1x128x128xf32, #tpu.memory_space<vmem>>, %arg15: memref<1x1x128xf32, #tpu.memory_space<vmem>>, %arg16: memref<1x1x128xf32, #tpu.memory_space<vmem>>, %arg17: memref<1x1x128xf32, #tpu.memory_space<vmem>>, %arg18: memref<1x8x128xf32, #tpu.memory_space<vmem>>, %arg19: memref<8x128xf32, #tpu.memory_space<vmem>>) attributes {dimension_semantics = [#tpu.dimension_semantics<parallel>, #tpu.dimension_semantics<arbitrary>], iteration_bounds = array<i64: 2, 2>, scalar_prefetch = 0 : i64, scratch_operands = 1 : i64, tpu.core_type = #tpu.core_type<tc>, window_params = [{transform_indices = @transform_0, window_bounds = array<i64: 1, 8, 128>}, {transform_indices = @transform_1, window_bounds = array<i64: 1, 1, 8>}, {pipeline_mode = #tpu.pipeline_mode<synchronous>, transform_indices = @transform_2, window_bounds = array<i64: 1, 128>}, {pipeline_mode = #tpu.pipeline_mode<synchronous>, transform_indices = @transform_3, window_bounds = array<i64: 1, 128>}, {transform_indices = @transform_4, window_bounds = array<i64: 1, 128, 384>}, {transform_indices = @transform_5, window_bounds = array<i64: 1, 1, 384>}, {transform_indices = @transform_6, window_bounds = array<i64: 1, 128, 128>}, {transform_indices = @transform_7, window_bounds = array<i64: 1, 1, 128>}, {transform_indices = @transform_8, window_bounds = array<i64: 1, 1, 128>}, {transform_indices = @transform_9, window_bounds = array<i64: 1, 1, 128>}, {transform_indices = @transform_10, window_bounds = array<i64: 1, 128, 128>}, {transform_indices = @transform_11, window_bounds = array<i64: 1, 1, 128>}, {transform_indices = @transform_12, window_bounds = array<i64: 1, 128, 128>}, {transform_indices = @transform_13, window_bounds = array<i64: 1, 1, 128>}, {transform_indices = @transform_14, window_bounds = array<i64: 1, 1, 128>}, {transform_indices = @transform_15, window_bounds = array<i64: 1, 1, 128>}, {transform_indices = @transform_16, window_bounds = array<i64: 1, 8, 128>}]} {
    %0 = tpu.iota {dimensions = array<i32: 1>} : vector<1x128xi32>
    %c32_i32 = arith.constant 32 : i32
    %1 = vector.broadcast %c32_i32 : i32 to vector<1x128xi32>
    %2 = arith.cmpi slt, %0, %1 : vector<1x128xi32>
    %c0_i32 = arith.constant 0 : i32
    %3 = arith.cmpi eq, %arg1, %c0_i32 : i32
    %4 = arith.extui %3 : i1 to i32
    %c0_i32_0 = arith.constant 0 : i32
    %5 = arith.cmpi ne, %4, %c0_i32_0 : i32
    scf.if %5 {
      %c0_71 = arith.constant 0 : index
      %c0_72 = arith.constant 0 : index
      %c0_73 = arith.constant 0 : index
      %157 = vector.load %arg2[%c0_71, %c0_72, %c0_73] : memref<1x8x128xf32, #tpu.memory_space<vmem>>, vector<1x8x128xf32>
      %158 = vector.shape_cast %157 : vector<1x8x128xf32> to vector<8x128xf32>
      %c0_74 = arith.constant 0 : index
      %c0_75 = arith.constant 0 : index
      %159 = vector.load %arg4[%c0_74, %c0_75] : memref<1x128xf32, #tpu.memory_space<vmem>>, vector<1x128xf32>
      %c0_76 = arith.constant 0 : index
      %c0_77 = arith.constant 0 : index
      %160 = vector.load %arg5[%c0_76, %c0_77] : memref<1x128xf32, #tpu.memory_space<vmem>>, vector<1x128xf32>
      %cst_78 = arith.constant dense<0.000000e+00> : vector<8xf32>
      %161 = vector.multi_reduction <add>, %158, %cst_78 [1] : vector<8x128xf32> to vector<8xf32>
      %162 = vector.shape_cast %161 : vector<8xf32> to vector<8x1xf32>
      %cst_79 = arith.constant 3.125000e-02 : f32
      %163 = vector.broadcast %cst_79 : f32 to vector<8x1xf32>
      %164 = arith.mulf %162, %163 : vector<8x1xf32>
      %165 = vector.broadcast %164 : vector<8x1xf32> to vector<8x128xf32>
      %166 = arith.subf %158, %165 : vector<8x128xf32>
      %cst_80 = arith.constant 0.000000e+00 : f32
      %167 = vector.shape_cast %2 : vector<1x128xi1> to vector<1x128xi1>
      %168 = vector.broadcast %167 : vector<1x128xi1> to vector<8x128xi1>
      %169 = vector.broadcast %cst_80 : f32 to vector<8x128xf32>
      %170 = arith.select %168, %166, %169 : vector<8x128xi1>, vector<8x128xf32>
      %171 = arith.mulf %170, %170 : vector<8x128xf32>
      %cst_81 = arith.constant dense<0.000000e+00> : vector<8xf32>
      %172 = vector.multi_reduction <add>, %171, %cst_81 [1] : vector<8x128xf32> to vector<8xf32>
      %173 = vector.shape_cast %172 : vector<8xf32> to vector<8x1xf32>
      %cst_82 = arith.constant 3.125000e-02 : f32
      %174 = vector.broadcast %cst_82 : f32 to vector<8x1xf32>
      %175 = arith.mulf %173, %174 : vector<8x1xf32>
      %cst_83 = arith.constant 9.99999996E-13 : f32
      %176 = vector.broadcast %cst_83 : f32 to vector<8x1xf32>
      %177 = arith.addf %175, %176 : vector<8x1xf32>
      %178 = math.rsqrt %177 : vector<8x1xf32>
      %179 = vector.broadcast %178 : vector<8x1xf32> to vector<8x128xf32>
      %180 = arith.mulf %170, %179 : vector<8x128xf32>
      %181 = vector.broadcast %159 : vector<1x128xf32> to vector<8x128xf32>
      %182 = arith.mulf %180, %181 : vector<8x128xf32>
      %183 = vector.broadcast %160 : vector<1x128xf32> to vector<8x128xf32>
      %184 = arith.addf %182, %183 : vector<8x128xf32>
      %c0_84 = arith.constant 0 : index
      %c0_85 = arith.constant 0 : index
      %185 = vector.load %arg19[%c0_84, %c0_85] : memref<8x128xf32, #tpu.memory_space<vmem>>, vector<8x128xf32>
      tpu.vector_store %arg19[%c0_84, %c0_85], %184 {strides = array<i32>} : memref<8x128xf32, #tpu.memory_space<vmem>>, vector<8x128xf32>,
    } else {
    }
    %c0 = arith.constant 0 : index
    %c0_1 = arith.constant 0 : index
    %6 = vector.load %arg19[%c0, %c0_1] : memref<8x128xf32, #tpu.memory_space<vmem>>, vector<8x128xf32>
    %c0_2 = arith.constant 0 : index
    %c0_3 = arith.constant 0 : index
    %c0_4 = arith.constant 0 : index
    %7 = vector.load %arg3[%c0_2, %c0_3, %c0_4] : memref<1x1x8xf32, #tpu.memory_space<vmem>>, vector<1x1x8xf32>
    %8 = vector.shape_cast %7 : vector<1x1x8xf32> to vector<1x8xf32>
    %cst = arith.constant 5.000000e-01 : f32
    %9 = vector.broadcast %cst : f32 to vector<1x8xf32>
    %10 = arith.cmpf ogt, %8, %9 : vector<1x8xf32>
    %cst_5 = arith.constant 0.000000e+00 : f32
    %cst_6 = arith.constant -1.000000e+09 : f32
    %11 = vector.broadcast %cst_5 : f32 to vector<1x8xf32>
    %12 = vector.broadcast %cst_6 : f32 to vector<1x8xf32>
    %13 = arith.select %10, %11, %12 : vector<1x8xi1>, vector<1x8xf32>
    %c0_7 = arith.constant 0 : index
    %c0_8 = arith.constant 0 : index
    %c0_9 = arith.constant 0 : index
    %14 = vector.load %arg6[%c0_7, %c0_8, %c0_9] : memref<1x128x384xf32, #tpu.memory_space<vmem>>, vector<1x128x384xf32>
    %15 = vector.shape_cast %14 : vector<1x128x384xf32> to vector<128x384xf32>
    %cst_10 = arith.constant dense<0.000000e+00> : vector<8x384xf32>
    %16 = tpu.matmul %6, %15, %cst_10 {dimension_numbers = #tpu.dot_dimension_numbers<[1], [0], [0], [1], [0, 0, 1, 1], [], []>} : vector<8x128xf32>, vector<128x384xf32>, vector<8x384xf32> -> vector<8x384xf32>
    %c0_11 = arith.constant 0 : index
    %c0_12 = arith.constant 0 : index
    %c0_13 = arith.constant 0 : index
    %17 = vector.load %arg7[%c0_11, %c0_12, %c0_13] : memref<1x1x384xf32, #tpu.memory_space<vmem>>, vector<1x1x384xf32>
    %18 = vector.shape_cast %17 : vector<1x1x384xf32> to vector<1x384xf32>
    %19 = vector.broadcast %18 : vector<1x384xf32> to vector<8x384xf32>
    %20 = arith.addf %16, %19 : vector<8x384xf32>
    %21 = vector.extract_strided_slice %20 {offsets = [0, 0], sizes = [8, 128], strides = [1, 1]} : vector<8x384xf32> to vector<8x128xf32>
    %cst_14 = arith.constant 2.500000e-01 : f32
    %22 = vector.broadcast %cst_14 : f32 to vector<8x128xf32>
    %23 = arith.mulf %21, %22 : vector<8x128xf32>
    %24 = vector.extract_strided_slice %20 {offsets = [0, 128], sizes = [8, 128], strides = [1, 1]} : vector<8x384xf32> to vector<8x128xf32>
    %25 = vector.extract_strided_slice %20 {offsets = [0, 256], sizes = [8, 128], strides = [1, 1]} : vector<8x384xf32> to vector<8x128xf32>
    %26 = vector.extract_strided_slice %23 {offsets = [0, 0], sizes = [8, 64], strides = [1, 1]} : vector<8x128xf32> to vector<8x64xf32>
    %27 = vector.extract_strided_slice %23 {offsets = [0, 64], sizes = [8, 64], strides = [1, 1]} : vector<8x128xf32> to vector<8x64xf32>
    %28 = vector.shape_cast %26 : vector<8x64xf32> to vector<1x8x64xf32>
    %29 = vector.shape_cast %27 : vector<8x64xf32> to vector<1x8x64xf32>
    %30 = tpu.concatenate %28, %29 in 0 : vector<1x8x64xf32>, vector<1x8x64xf32> -> vector<2x8x64xf32>
    %31 = vector.extract_strided_slice %24 {offsets = [0, 0], sizes = [8, 64], strides = [1, 1]} : vector<8x128xf32> to vector<8x64xf32>
    %32 = vector.extract_strided_slice %24 {offsets = [0, 64], sizes = [8, 64], strides = [1, 1]} : vector<8x128xf32> to vector<8x64xf32>
    %33 = vector.shape_cast %31 : vector<8x64xf32> to vector<1x8x64xf32>
    %34 = vector.shape_cast %32 : vector<8x64xf32> to vector<1x8x64xf32>
    %35 = tpu.concatenate %33, %34 in 0 : vector<1x8x64xf32>, vector<1x8x64xf32> -> vector<2x8x64xf32>
    %36 = vector.extract_strided_slice %25 {offsets = [0, 0], sizes = [8, 64], strides = [1, 1]} : vector<8x128xf32> to vector<8x64xf32>
    %37 = vector.extract_strided_slice %25 {offsets = [0, 64], sizes = [8, 64], strides = [1, 1]} : vector<8x128xf32> to vector<8x64xf32>
    %38 = vector.shape_cast %36 : vector<8x64xf32> to vector<1x8x64xf32>
    %39 = vector.shape_cast %37 : vector<8x64xf32> to vector<1x8x64xf32>
    %40 = tpu.concatenate %38, %39 in 0 : vector<1x8x64xf32>, vector<1x8x64xf32> -> vector<2x8x64xf32>
    "tpu.trace_start"() <{level = 10 : i32, message = "hqd,hkd->hqk"}> : () -> ()
    %cst_15 = arith.constant dense<0.000000e+00> : vector<2x8x8xf32>
    %41 = tpu.matmul %30, %35, %cst_15 {dimension_numbers = #tpu.dot_dimension_numbers<[2], [2], [1], [1], [0, 0, 0, 1, 1, 1], [0], [0]>} : vector<2x8x64xf32>, vector<2x8x64xf32>, vector<2x8x8xf32> -> vector<2x8x8xf32>
    "tpu.trace_stop"() : () -> ()
    %42 = vector.shape_cast %13 : vector<1x8xf32> to vector<1x1x8xf32>
    %43 = vector.broadcast %42 : vector<1x1x8xf32> to vector<2x8x8xf32>
    %44 = arith.addf %41, %43 : vector<2x8x8xf32>
    %cst_16 = arith.constant dense<0xFF800000> : vector<2x8xf32>
    %45 = vector.multi_reduction <maximumf>, %44, %cst_16 [2] : vector<2x8x8xf32> to vector<2x8xf32>
    %46 = vector.shape_cast %45 : vector<2x8xf32> to vector<2x8x1xf32>
    %47 = vector.broadcast %46 : vector<2x8x1xf32> to vector<2x8x8xf32>
    %48 = arith.subf %44, %47 : vector<2x8x8xf32>
    %49 = math.exp %48 : vector<2x8x8xf32>
    %cst_17 = arith.constant dense<0.000000e+00> : vector<2x8xf32>
    %50 = vector.multi_reduction <add>, %49, %cst_17 [2] : vector<2x8x8xf32> to vector<2x8xf32>
    %51 = vector.shape_cast %50 : vector<2x8xf32> to vector<2x8x1xf32>
    %52 = tpu.reciprocal %51 {approx = true} : vector<2x8x1xf32> -> vector<2x8x1xf32>
    %53 = vector.broadcast %52 : vector<2x8x1xf32> to vector<2x8x8xf32>
    %54 = arith.mulf %49, %53 : vector<2x8x8xf32>
    "tpu.trace_start"() <{level = 10 : i32, message = "hqk,hkd->hqd"}> : () -> ()
    %cst_18 = arith.constant dense<0.000000e+00> : vector<2x8x64xf32>
    %55 = tpu.matmul %54, %40, %cst_18 {dimension_numbers = #tpu.dot_dimension_numbers<[2], [1], [1], [2], [0, 0, 0, 1, 1, 2], [0], [0]>} : vector<2x8x8xf32>, vector<2x8x64xf32>, vector<2x8x64xf32> -> vector<2x8x64xf32>
    "tpu.trace_stop"() : () -> ()
    %56 = vector.extract_strided_slice %55 {offsets = [0, 0, 0], sizes = [1, 8, 64], strides = [1, 1, 1]} : vector<2x8x64xf32> to vector<1x8x64xf32>
    %57 = vector.shape_cast %56 : vector<1x8x64xf32> to vector<8x64xf32>
    %58 = vector.extract_strided_slice %55 {offsets = [1, 0, 0], sizes = [1, 8, 64], strides = [1, 1, 1]} : vector<2x8x64xf32> to vector<1x8x64xf32>
    %59 = vector.shape_cast %58 : vector<1x8x64xf32> to vector<8x64xf32>
    %60 = tpu.concatenate %57, %59 in 1 : vector<8x64xf32>, vector<8x64xf32> -> vector<8x128xf32>
    %c0_19 = arith.constant 0 : index
    %c0_20 = arith.constant 0 : index
    %c0_21 = arith.constant 0 : index
    %61 = vector.load %arg8[%c0_19, %c0_20, %c0_21] : memref<1x128x128xf32, #tpu.memory_space<vmem>>, vector<1x128x128xf32>
    %62 = vector.shape_cast %61 : vector<1x128x128xf32> to vector<128x128xf32>
    %cst_22 = arith.constant dense<0.000000e+00> : vector<8x128xf32>
    %63 = tpu.matmul %60, %62, %cst_22 {dimension_numbers = #tpu.dot_dimension_numbers<[1], [0], [0], [1], [0, 0, 1, 1], [], []>} : vector<8x128xf32>, vector<128x128xf32>, vector<8x128xf32> -> vector<8x128xf32>
    %c0_23 = arith.constant 0 : index
    %c0_24 = arith.constant 0 : index
    %c0_25 = arith.constant 0 : index
    %64 = vector.load %arg9[%c0_23, %c0_24, %c0_25] : memref<1x1x128xf32, #tpu.memory_space<vmem>>, vector<1x1x128xf32>
    %65 = vector.shape_cast %64 : vector<1x1x128xf32> to vector<1x128xf32>
    %66 = vector.broadcast %65 : vector<1x128xf32> to vector<8x128xf32>
    %67 = arith.addf %63, %66 : vector<8x128xf32>
    %68 = arith.addf %67, %6 : vector<8x128xf32>
    %c0_26 = arith.constant 0 : index
    %c0_27 = arith.constant 0 : index
    %c0_28 = arith.constant 0 : index
    %69 = vector.load %arg10[%c0_26, %c0_27, %c0_28] : memref<1x1x128xf32, #tpu.memory_space<vmem>>, vector<1x1x128xf32>
    %70 = vector.shape_cast %69 : vector<1x1x128xf32> to vector<1x128xf32>
    %c0_29 = arith.constant 0 : index
    %c0_30 = arith.constant 0 : index
    %c0_31 = arith.constant 0 : index
    %71 = vector.load %arg11[%c0_29, %c0_30, %c0_31] : memref<1x1x128xf32, #tpu.memory_space<vmem>>, vector<1x1x128xf32>
    %72 = vector.shape_cast %71 : vector<1x1x128xf32> to vector<1x128xf32>
    %cst_32 = arith.constant dense<0.000000e+00> : vector<8xf32>
    %73 = vector.multi_reduction <add>, %68, %cst_32 [1] : vector<8x128xf32> to vector<8xf32>
    %74 = vector.shape_cast %73 : vector<8xf32> to vector<8x1xf32>
    %cst_33 = arith.constant 3.125000e-02 : f32
    %75 = vector.broadcast %cst_33 : f32 to vector<8x1xf32>
    %76 = arith.mulf %74, %75 : vector<8x1xf32>
    %77 = vector.broadcast %76 : vector<8x1xf32> to vector<8x128xf32>
    %78 = arith.subf %68, %77 : vector<8x128xf32>
    %cst_34 = arith.constant 0.000000e+00 : f32
    %79 = vector.shape_cast %2 : vector<1x128xi1> to vector<1x128xi1>
    %80 = vector.broadcast %79 : vector<1x128xi1> to vector<8x128xi1>
    %81 = vector.broadcast %cst_34 : f32 to vector<8x128xf32>
    %82 = arith.select %80, %78, %81 : vector<8x128xi1>, vector<8x128xf32>
    %83 = arith.mulf %82, %82 : vector<8x128xf32>
    %cst_35 = arith.constant dense<0.000000e+00> : vector<8xf32>
    %84 = vector.multi_reduction <add>, %83, %cst_35 [1] : vector<8x128xf32> to vector<8xf32>
    %85 = vector.shape_cast %84 : vector<8xf32> to vector<8x1xf32>
    %cst_36 = arith.constant 3.125000e-02 : f32
    %86 = vector.broadcast %cst_36 : f32 to vector<8x1xf32>
    %87 = arith.mulf %85, %86 : vector<8x1xf32>
    %cst_37 = arith.constant 9.99999996E-13 : f32
    %88 = vector.broadcast %cst_37 : f32 to vector<8x1xf32>
    %89 = arith.addf %87, %88 : vector<8x1xf32>
    %90 = math.rsqrt %89 : vector<8x1xf32>
    %91 = vector.broadcast %90 : vector<8x1xf32> to vector<8x128xf32>
    %92 = arith.mulf %82, %91 : vector<8x128xf32>
    %93 = vector.broadcast %70 : vector<1x128xf32> to vector<8x128xf32>
    %94 = arith.mulf %92, %93 : vector<8x128xf32>
    %95 = vector.broadcast %72 : vector<1x128xf32> to vector<8x128xf32>
    %96 = arith.addf %94, %95 : vector<8x128xf32>
    %c0_38 = arith.constant 0 : index
    %c0_39 = arith.constant 0 : index
    %c0_40 = arith.constant 0 : index
    %97 = vector.load %arg12[%c0_38, %c0_39, %c0_40] : memref<1x128x128xf32, #tpu.memory_space<vmem>>, vector<1x128x128xf32>
    %98 = vector.shape_cast %97 : vector<1x128x128xf32> to vector<128x128xf32>
    %cst_41 = arith.constant dense<0.000000e+00> : vector<8x128xf32>
    %99 = tpu.matmul %96, %98, %cst_41 {dimension_numbers = #tpu.dot_dimension_numbers<[1], [0], [0], [1], [0, 0, 1, 1], [], []>} : vector<8x128xf32>, vector<128x128xf32>, vector<8x128xf32> -> vector<8x128xf32>
    %c0_42 = arith.constant 0 : index
    %c0_43 = arith.constant 0 : index
    %c0_44 = arith.constant 0 : index
    %100 = vector.load %arg13[%c0_42, %c0_43, %c0_44] : memref<1x1x128xf32, #tpu.memory_space<vmem>>, vector<1x1x128xf32>
    %101 = vector.shape_cast %100 : vector<1x1x128xf32> to vector<1x128xf32>
    %102 = vector.broadcast %101 : vector<1x128xf32> to vector<8x128xf32>
    %103 = arith.addf %99, %102 : vector<8x128xf32>
    %cst_45 = arith.constant 5.000000e-01 : f32
    %104 = vector.broadcast %cst_45 : f32 to vector<8x128xf32>
    %105 = arith.mulf %104, %103 : vector<8x128xf32>
    %cst_46 = arith.constant 4.471500e-02 : f32
    %106 = vector.broadcast %cst_46 : f32 to vector<8x128xf32>
    %107 = arith.mulf %106, %103 : vector<8x128xf32>
    %108 = arith.mulf %107, %103 : vector<8x128xf32>
    %109 = arith.mulf %108, %103 : vector<8x128xf32>
    %110 = arith.addf %103, %109 : vector<8x128xf32>
    %cst_47 = arith.constant 0.797884583 : f32
    %111 = vector.broadcast %cst_47 : f32 to vector<8x128xf32>
    %112 = arith.mulf %111, %110 : vector<8x128xf32>
    %113 = math.tanh %112 : vector<8x128xf32>
    %cst_48 = arith.constant 1.000000e+00 : f32
    %114 = vector.broadcast %cst_48 : f32 to vector<8x128xf32>
    %115 = arith.addf %114, %113 : vector<8x128xf32>
    %116 = arith.mulf %105, %115 : vector<8x128xf32>
    %c0_49 = arith.constant 0 : index
    %c0_50 = arith.constant 0 : index
    %c0_51 = arith.constant 0 : index
    %117 = vector.load %arg14[%c0_49, %c0_50, %c0_51] : memref<1x128x128xf32, #tpu.memory_space<vmem>>, vector<1x128x128xf32>
    %118 = vector.shape_cast %117 : vector<1x128x128xf32> to vector<128x128xf32>
    %cst_52 = arith.constant dense<0.000000e+00> : vector<8x128xf32>
    %119 = tpu.matmul %116, %118, %cst_52 {dimension_numbers = #tpu.dot_dimension_numbers<[1], [0], [0], [1], [0, 0, 1, 1], [], []>} : vector<8x128xf32>, vector<128x128xf32>, vector<8x128xf32> -> vector<8x128xf32>
    %c0_53 = arith.constant 0 : index
    %c0_54 = arith.constant 0 : index
    %c0_55 = arith.constant 0 : index
    %120 = vector.load %arg15[%c0_53, %c0_54, %c0_55] : memref<1x1x128xf32, #tpu.memory_space<vmem>>, vector<1x1x128xf32>
    %121 = vector.shape_cast %120 : vector<1x1x128xf32> to vector<1x128xf32>
    %122 = vector.broadcast %121 : vector<1x128xf32> to vector<8x128xf32>
    %123 = arith.addf %119, %122 : vector<8x128xf32>
    %124 = arith.addf %123, %96 : vector<8x128xf32>
    %c0_56 = arith.constant 0 : index
    %c0_57 = arith.constant 0 : index
    %c0_58 = arith.constant 0 : index
    %125 = vector.load %arg16[%c0_56, %c0_57, %c0_58] : memref<1x1x128xf32, #tpu.memory_space<vmem>>, vector<1x1x128xf32>
    %126 = vector.shape_cast %125 : vector<1x1x128xf32> to vector<1x128xf32>
    %c0_59 = arith.constant 0 : index
    %c0_60 = arith.constant 0 : index
    %c0_61 = arith.constant 0 : index
    %127 = vector.load %arg17[%c0_59, %c0_60, %c0_61] : memref<1x1x128xf32, #tpu.memory_space<vmem>>, vector<1x1x128xf32>
    %128 = vector.shape_cast %127 : vector<1x1x128xf32> to vector<1x128xf32>
    %cst_62 = arith.constant dense<0.000000e+00> : vector<8xf32>
    %129 = vector.multi_reduction <add>, %124, %cst_62 [1] : vector<8x128xf32> to vector<8xf32>
    %130 = vector.shape_cast %129 : vector<8xf32> to vector<8x1xf32>
    %cst_63 = arith.constant 3.125000e-02 : f32
    %131 = vector.broadcast %cst_63 : f32 to vector<8x1xf32>
    %132 = arith.mulf %130, %131 : vector<8x1xf32>
    %133 = vector.broadcast %132 : vector<8x1xf32> to vector<8x128xf32>
    %134 = arith.subf %124, %133 : vector<8x128xf32>
    %cst_64 = arith.constant 0.000000e+00 : f32
    %135 = vector.shape_cast %2 : vector<1x128xi1> to vector<1x128xi1>
    %136 = vector.broadcast %135 : vector<1x128xi1> to vector<8x128xi1>
    %137 = vector.broadcast %cst_64 : f32 to vector<8x128xf32>
    %138 = arith.select %136, %134, %137 : vector<8x128xi1>, vector<8x128xf32>
    %139 = arith.mulf %138, %138 : vector<8x128xf32>
    %cst_65 = arith.constant dense<0.000000e+00> : vector<8xf32>
    %140 = vector.multi_reduction <add>, %139, %cst_65 [1] : vector<8x128xf32> to vector<8xf32>
    %141 = vector.shape_cast %140 : vector<8xf32> to vector<8x1xf32>
    %cst_66 = arith.constant 3.125000e-02 : f32
    %142 = vector.broadcast %cst_66 : f32 to vector<8x1xf32>
    %143 = arith.mulf %141, %142 : vector<8x1xf32>
    %cst_67 = arith.constant 9.99999996E-13 : f32
    %144 = vector.broadcast %cst_67 : f32 to vector<8x1xf32>
    %145 = arith.addf %143, %144 : vector<8x1xf32>
    %146 = math.rsqrt %145 : vector<8x1xf32>
    %147 = vector.broadcast %146 : vector<8x1xf32> to vector<8x128xf32>
    %148 = arith.mulf %138, %147 : vector<8x128xf32>
    %149 = vector.broadcast %126 : vector<1x128xf32> to vector<8x128xf32>
    %150 = arith.mulf %148, %149 : vector<8x128xf32>
    %151 = vector.broadcast %128 : vector<1x128xf32> to vector<8x128xf32>
    %152 = arith.addf %150, %151 : vector<8x128xf32>
    %c0_68 = arith.constant 0 : index
    %c0_69 = arith.constant 0 : index
    %153 = vector.load %arg19[%c0_68, %c0_69] : memref<8x128xf32, #tpu.memory_space<vmem>>, vector<8x128xf32>
    tpu.vector_store %arg19[%c0_68, %c0_69], %152 {strides = array<i32>} : memref<8x128xf32, #tpu.memory_space<vmem>>, vector<8x128xf32>,
    %c1_i32 = arith.constant 1 : i32
    %154 = arith.cmpi eq, %arg1, %c1_i32 : i32
    %155 = arith.extui %154 : i1 to i32
    %c0_i32_70 = arith.constant 0 : i32
    %156 = arith.cmpi ne, %155, %c0_i32_70 : i32
    scf.if %156 {
      %c0_71 = arith.constant 0 : index
      %c0_72 = arith.constant 0 : index
      %c0_73 = arith.constant 0 : index
      %157 = vector.load %arg18[%c0_71, %c0_72, %c0_73] : memref<1x8x128xf32, #tpu.memory_space<vmem>>, vector<1x8x128xf32>
      %158 = vector.shape_cast %157 : vector<1x8x128xf32> to vector<8x128xf32>
      %159 = vector.shape_cast %152 : vector<8x128xf32> to vector<1x8x128xf32>
      tpu.vector_store %arg18[%c0_71, %c0_72, %c0_73], %159 {strides = array<i32>} : memref<1x8x128xf32, #tpu.memory_space<vmem>>, vector<1x8x128xf32>,
    } else {
    }
    return
  }
  func.func @transform_0(%arg0: i32, %arg1: i32) -> (i32, i32, i32) {
    %c0_i32 = arith.constant 0 : i32
    %c0_i32_0 = arith.constant 0 : i32
    %c0_i32_1 = arith.constant 0 : i32
    return %arg0, %c0_i32, %c0_i32_0 : i32, i32, i32
  }
  func.func @transform_1(%arg0: i32, %arg1: i32) -> (i32, i32, i32) {
    %c0_i32 = arith.constant 0 : i32
    %c0_i32_0 = arith.constant 0 : i32
    %c0_i32_1 = arith.constant 0 : i32
    return %arg0, %c0_i32, %c0_i32_0 : i32, i32, i32
  }
  func.func @transform_2(%arg0: i32, %arg1: i32) -> (i32, i32) {
    %c0_i32 = arith.constant 0 : i32
    %c0_i32_0 = arith.constant 0 : i32
    %c0_i32_1 = arith.constant 0 : i32
    return %c0_i32, %c0_i32_0 : i32, i32
  }
  func.func @transform_3(%arg0: i32, %arg1: i32) -> (i32, i32) {
    %c0_i32 = arith.constant 0 : i32
    %c0_i32_0 = arith.constant 0 : i32
    %c0_i32_1 = arith.constant 0 : i32
    return %c0_i32, %c0_i32_0 : i32, i32
  }
  func.func @transform_4(%arg0: i32, %arg1: i32) -> (i32, i32, i32) {
    %c0_i32 = arith.constant 0 : i32
    %c0_i32_0 = arith.constant 0 : i32
    %c0_i32_1 = arith.constant 0 : i32
    return %arg1, %c0_i32, %c0_i32_0 : i32, i32, i32
  }
  func.func @transform_5(%arg0: i32, %arg1: i32) -> (i32, i32, i32) {
    %c0_i32 = arith.constant 0 : i32
    %c0_i32_0 = arith.constant 0 : i32
    %c0_i32_1 = arith.constant 0 : i32
    return %arg1, %c0_i32, %c0_i32_0 : i32, i32, i32
  }
  func.func @transform_6(%arg0: i32, %arg1: i32) -> (i32, i32, i32) {
    %c0_i32 = arith.constant 0 : i32
    %c0_i32_0 = arith.constant 0 : i32
    %c0_i32_1 = arith.constant 0 : i32
    return %arg1, %c0_i32, %c0_i32_0 : i32, i32, i32
  }
  func.func @transform_7(%arg0: i32, %arg1: i32) -> (i32, i32, i32) {
    %c0_i32 = arith.constant 0 : i32
    %c0_i32_0 = arith.constant 0 : i32
    %c0_i32_1 = arith.constant 0 : i32
    return %arg1, %c0_i32, %c0_i32_0 : i32, i32, i32
  }
  func.func @transform_8(%arg0: i32, %arg1: i32) -> (i32, i32, i32) {
    %c0_i32 = arith.constant 0 : i32
    %c0_i32_0 = arith.constant 0 : i32
    %c0_i32_1 = arith.constant 0 : i32
    return %arg1, %c0_i32, %c0_i32_0 : i32, i32, i32
  }
  func.func @transform_9(%arg0: i32, %arg1: i32) -> (i32, i32, i32) {
    %c0_i32 = arith.constant 0 : i32
    %c0_i32_0 = arith.constant 0 : i32
    %c0_i32_1 = arith.constant 0 : i32
    return %arg1, %c0_i32, %c0_i32_0 : i32, i32, i32
  }
  func.func @transform_10(%arg0: i32, %arg1: i32) -> (i32, i32, i32) {
    %c0_i32 = arith.constant 0 : i32
    %c0_i32_0 = arith.constant 0 : i32
    %c0_i32_1 = arith.constant 0 : i32
    return %arg1, %c0_i32, %c0_i32_0 : i32, i32, i32
  }
  func.func @transform_11(%arg0: i32, %arg1: i32) -> (i32, i32, i32) {
    %c0_i32 = arith.constant 0 : i32
    %c0_i32_0 = arith.constant 0 : i32
    %c0_i32_1 = arith.constant 0 : i32
    return %arg1, %c0_i32, %c0_i32_0 : i32, i32, i32
  }
  func.func @transform_12(%arg0: i32, %arg1: i32) -> (i32, i32, i32) {
    %c0_i32 = arith.constant 0 : i32
    %c0_i32_0 = arith.constant 0 : i32
    %c0_i32_1 = arith.constant 0 : i32
    return %arg1, %c0_i32, %c0_i32_0 : i32, i32, i32
  }
  func.func @transform_13(%arg0: i32, %arg1: i32) -> (i32, i32, i32) {
    %c0_i32 = arith.constant 0 : i32
    %c0_i32_0 = arith.constant 0 : i32
    %c0_i32_1 = arith.constant 0 : i32
    return %arg1, %c0_i32, %c0_i32_0 : i32, i32, i32
  }
  func.func @transform_14(%arg0: i32, %arg1: i32) -> (i32, i32, i32) {
    %c0_i32 = arith.constant 0 : i32
    %c0_i32_0 = arith.constant 0 : i32
    %c0_i32_1 = arith.constant 0 : i32
    return %arg1, %c0_i32, %c0_i32_0 : i32, i32, i32
  }
  func.func @transform_15(%arg0: i32, %arg1: i32) -> (i32, i32, i32) {
    %c0_i32 = arith.constant 0 : i32
    %c0_i32_0 = arith.constant 0 : i32
    %c0_i32_1 = arith.constant 0 : i32
    return %arg1, %c0_i32, %c0_i32_0 : i32, i32, i32
  }
  func.func @transform_16(%arg0: i32, %arg1: i32) -> (i32, i32, i32) {
    %c0_i32 = arith.constant 0 : i32
    %c0_i32_0 = arith.constant 0 : i32
    %c0_i32_1 = arith.constant 0 : i32
    return %arg0, %c0_i32, %c0_i32_0 : i32, i32, i32
  }
}

</mosaic_0001>

<llo_original>
// kernel: _lambda_.1
$region0: #{_lambda_.1}
  #allocation0 [shape = 'u32[]', space=smem, size = 0x4, offset = 0x4, fixed_abs, tag = 'smem constant byte address 0x4 - core index']
  #allocation1 [shape = 'u32[72,128]{1,0:T(1,128)}', space=vmem, size = 0x9000, scoped, tag = 'internal scratch']
  #allocation2 [shape = 'f32[8,128]{1,0:T(8,128)}', space=vmem, size = 0x1000, scoped, tag = 'scratch operand']
  %s0 = inlined_call_operand.vmem [shape: f32[2,8,128], index: 0, kind: input, shape index: {}]
  %s1 = inlined_call_operand.vmem [shape: f32[2,1,8], index: 1, kind: input, shape index: {}]
  %s2 = inlined_call_operand.vmem [shape: f32[1,128], index: 2, kind: input, shape index: {}]
  %s3 = inlined_call_operand.vmem [shape: f32[1,128], index: 3, kind: input, shape index: {}]
  %s4 = inlined_call_operand.hbm [shape: f32[2,128,384], index: 4, kind: input, shape index: {}]
  %s5 = inlined_call_operand.vmem [shape: f32[2,1,384], index: 5, kind: input, shape index: {}]
  %s6 = inlined_call_operand.hbm [shape: f32[2,128,128], index: 6, kind: input, shape index: {}]
  %s7 = inlined_call_operand.vmem [shape: f32[2,1,128], index: 7, kind: input, shape index: {}]
  %s8 = inlined_call_operand.vmem [shape: f32[2,1,128], index: 8, kind: input, shape index: {}]
  %s9 = inlined_call_operand.vmem [shape: f32[2,1,128], index: 9, kind: input, shape index: {}]
  %s10 = inlined_call_operand.hbm [shape: f32[2,128,128], index: 10, kind: input, shape index: {}]
  %s11 = inlined_call_operand.vmem [shape: f32[2,1,128], index: 11, kind: input, shape index: {}]
  %s12 = inlined_call_operand.hbm [shape: f32[2,128,128], index: 12, kind: input, shape index: {}]
  %s13 = inlined_call_operand.vmem [shape: f32[2,1,128], index: 13, kind: input, shape index: {}]
  %s14 = inlined_call_operand.vmem [shape: f32[2,1,128], index: 14, kind: input, shape index: {}]
  %s15 = inlined_call_operand.vmem [shape: f32[2,1,128], index: 15, kind: input, shape index: {}]
  %s16 = inlined_call_operand.vmem [shape: f32[2,8,128], index: 16, kind: output, shape index: {}]
  %s17 = sld [smem:[#allocation0]]
  $region121: #{_lambda_.1} parent=0
    _
  %s19 = ssub.s32 1, %s17
  %s20 = scalar_select 0, %s19, %s17
  $region1: #{_lambda_.1} parent=0
    #allocation3 [shape = 'u8[393216]{0}', space=vmem, size = 0x60000, scoped, tag = 'input window, operand 4']
    #allocation4 [shape = 's32[2]{0}', space=sflag, size = 0x8, scoped, tag = 'scoped memory for _lambda_.1']
    #allocation5 [shape = 'u8[131072]{0}', space=vmem, size = 0x20000, scoped, tag = 'input window, operand 6']
    #allocation6 [shape = 's32[2]{0}', space=sflag, size = 0x8, scoped, tag = 'scoped memory for _lambda_.1']
    #allocation7 [shape = 'u8[131072]{0}', space=vmem, size = 0x20000, scoped, tag = 'input window, operand 10']
    #allocation8 [shape = 'u8[131072]{0}', space=vmem, size = 0x20000, scoped, tag = 'input window, operand 12']
    #allocation9 [shape = 's32[2]{0}', space=sflag, size = 0x8, scoped, tag = 'scoped memory for _lambda_.1']
    %21 = vsyncpa [#allocation4], 0
    %s22 = scalar_lea.sflag [#allocation4], 1
    %23 = vsyncpa %s22, 0
    %24 = vsyncpa [#allocation6], 0
    %s25 = scalar_lea.sflag [#allocation6], 1
    %26 = vsyncpa %s25, 0
    %27 = vsyncpa [#allocation9], 0
    %s28 = scalar_lea.sflag [#allocation9], 1
    %29 = vsyncpa %s28, 0
    loop: start=0, step=1, limit=6
    $region2: #{_lambda_.1} parent=1 // loop_pre_header
      _
    $region3: #{_lambda_.1} parent=1 // loop_header
      %s31 = sphi 0, %s35
      %p32 = scmp.ge.s32.totalorder %s31, 6
      %s38 = sphi 0, %s50
      %s39 = sphi 0, %s46
      %s40 = sphi 0, %s38
      %s41 = sphi 0, %s39
      %s42 = sphi 0, %s40
      %s43 = sphi 0, %s41
      %s53 = sphi 0, %s55
      %s56 = sphi 0, %s53
      %s57 = sphi 0, %s56
      %s73 = sphi 0, %s57
      %s79 = sphi 0, %s81
      %s82 = sphi 0, %s79
      %s83 = sphi 0, %s82
      %s99 = sphi 0, %s83
      %s103 = sphi 0, %s103
      %s105 = sphi 0, %s103
      %s106 = sphi 0, %s105
      %s120 = sphi 0, %s106
      %s124 = sphi 0, %s124
      %s126 = sphi 0, %s124
      %s127 = sphi 0, %s126
      %s141 = sphi 0, %s127
      %s147 = sphi 0, %s149
      %s150 = sphi 0, %s147
      %s151 = sphi 0, %s150
      %s167 = sphi 0, %s151
      %s173 = sphi 0, %s175
      %s176 = sphi 0, %s173
      %s177 = sphi 0, %s176
      %s193 = sphi 0, %s177
      %s199 = sphi 0, %s201
      %s202 = sphi 0, %s199
      %s203 = sphi 0, %s202
      %s219 = sphi 0, %s203
      %s225 = sphi 0, %s227
      %s228 = sphi 0, %s225
      %s229 = sphi 0, %s228
      %s245 = sphi 0, %s229
      %s251 = sphi 0, %s253
      %s254 = sphi 0, %s251
      %s255 = sphi 0, %s254
      %s271 = sphi 0, %s255
      %s277 = sphi 0, %s279
      %s280 = sphi 0, %s277
      %s281 = sphi 0, %s280
      %s297 = sphi 0, %s281
      %s303 = sphi 0, %s305
      %s306 = sphi 0, %s303
      %s307 = sphi 0, %s306
      %s323 = sphi 0, %s307
      %s329 = sphi 0, %s331
      %s332 = sphi 0, %s329
      %s333 = sphi 0, %s332
      %s349 = sphi 0, %s333
      %s355 = sphi 0, %s357
      %s358 = sphi 0, %s355
      %s359 = sphi 0, %s358
      %s375 = sphi 0, %s359
      %s381 = sphi 0, %s383
      %s384 = sphi 0, %s381
      %s385 = sphi 0, %s384
      %s401 = sphi 0, %s385
      %s407 = sphi 0, %s409
      %s410 = sphi 0, %s407
      %s411 = sphi 0, %s410
      %s427 = sphi 0, %s411
      %s433 = sphi 0, %s435
      %s436 = sphi 0, %s433
      %s437 = sphi 0, %s436
      %s453 = sphi 0, %s437
      %s459 = sphi 0, %s461
      %s462 = sphi 0, %s459
      %s463 = sphi 0, %s462
      %s479 = sphi 0, %s463
    $region4: #{_lambda_.1} parent=1 // loop_header_branch
      %34 = sbr.rel (%p32) target = $region8
    $region5: #{_lambda_.1} parent=1 // loop_body
      %s36 = ssub.s32 %s31, 1
      %s37 = ssub.s32 %s31, 2
      %s44 = sadd.s32 1, %s39
      %p45 = scmp.ge.s32.totalorder %s44, 2
      %s46 = scalar_select %p45, 0, %s44
      %s47 = sadd.s32 1, %s38
      %s48 = scalar_select %p45, %s47, %s38
      %p49 = scmp.ge.s32.totalorder %s48, 2
      %s50 = scalar_select %p49, 0, %s48
      %s51 = ssub.s32 %s38, %s50
      %p52 = scmp.eq.s32.totalorder %s51, 0
      %s54 = sadd.s32 %s53, 1
      %s55 = scalar_select %p52, %s53, %s54
      %p58 = pneg %p52
      %p59 = scmp.eq.s32.totalorder %s31, 3
      %p60 = por %p58, %p59
      %p61 = scmp.ne.s32.totalorder %s53, %s56
      %p62 = scmp.eq.s32.totalorder %s31, 0
      %p63 = por %p61, %p62
      %p64 = scmp.ne.s32.totalorder %s53, %s56
      %p65 = scmp.eq.s32.totalorder %s36, 3
      %p66 = por %p64, %p65
      %p67 = scmp.ne.s32.totalorder %s56, %s57
      %p68 = scmp.eq.s32.totalorder %s36, 0
      %p69 = por %p67, %p68
      %p70 = scmp.ne.s32.totalorder %s56, %s57
      %p71 = scmp.eq.s32.totalorder %s37, 3
      %p72 = por %p70, %p71
      %p74 = scmp.ne.s32.totalorder %s57, %s73
      %p75 = scmp.eq.s32.totalorder %s37, 0
      %p76 = por %p74, %p75
      %s77 = ssub.s32 %s38, %s50
      %p78 = scmp.eq.s32.totalorder %s77, 0
      %s80 = sadd.s32 %s79, 1
      %s81 = scalar_select %p78, %s79, %s80
      %p84 = pneg %p78
      %p85 = scmp.eq.s32.totalorder %s31, 3
      %p86 = por %p84, %p85
      %p87 = scmp.ne.s32.totalorder %s79, %s82
      %p88 = scmp.eq.s32.totalorder %s31, 0
      %p89 = por %p87, %p88
      %p90 = scmp.ne.s32.totalorder %s79, %s82
      %p91 = scmp.eq.s32.totalorder %s36, 3
      %p92 = por %p90, %p91
      %p93 = scmp.ne.s32.totalorder %s82, %s83
      %p94 = scmp.eq.s32.totalorder %s36, 0
      %p95 = por %p93, %p94
      %p96 = scmp.ne.s32.totalorder %s82, %s83
      %p97 = scmp.eq.s32.totalorder %s37, 3
      %p98 = por %p96, %p97
      %p100 = scmp.ne.s32.totalorder %s83, %s99
      %p101 = scmp.eq.s32.totalorder %s37, 0
      %p102 = por %p100, %p101
      %s104 = sadd.s32 %s103, 1
      %p107 = scmp.eq.s32.totalorder %s31, 3
      %p108 = scmp.ne.s32.totalorder %s103, %s105
      %p109 = scmp.eq.s32.totalorder %s31, 0
      %p110 = por %p108, %p109
      %p111 = scmp.ne.s32.totalorder %s103, %s105
      %p112 = scmp.eq.s32.totalorder %s36, 3
      %p113 = por %p111, %p112
      %p114 = scmp.ne.s32.totalorder %s105, %s106
      %p115 = scmp.eq.s32.totalorder %s36, 0
      %p116 = por %p114, %p115
      %p117 = scmp.ne.s32.totalorder %s105, %s106
      %p118 = scmp.eq.s32.totalorder %s37, 3
      %p119 = por %p117, %p118
      %p121 = scmp.ne.s32.totalorder %s106, %s120
      %p122 = scmp.eq.s32.totalorder %s37, 0
      %p123 = por %p121, %p122
      %s125 = sadd.s32 %s124, 1
      %p128 = scmp.eq.s32.totalorder %s31, 3
      %p129 = scmp.ne.s32.totalorder %s124, %s126
      %p130 = scmp.eq.s32.totalorder %s31, 0
      %p131 = por %p129, %p130
      %p132 = scmp.ne.s32.totalorder %s124, %s126
      %p133 = scmp.eq.s32.totalorder %s36, 3
      %p134 = por %p132, %p133
      %p135 = scmp.ne.s32.totalorder %s126, %s127
      %p136 = scmp.eq.s32.totalorder %s36, 0
      %p137 = por %p135, %p136
      %p138 = scmp.ne.s32.totalorder %s126, %s127
      %p139 = scmp.eq.s32.totalorder %s37, 3
      %p140 = por %p138, %p139
      %p142 = scmp.ne.s32.totalorder %s127, %s141
      %p143 = scmp.eq.s32.totalorder %s37, 0
      %p144 = por %p142, %p143
      %s145 = ssub.s32 %s39, %s46
      %p146 = scmp.eq.s32.totalorder %s145, 0
      %s148 = sadd.s32 %s147, 1
      %s149 = scalar_select %p146, %s147, %s148
      %p152 = pneg %p146
      %p153 = scmp.eq.s32.totalorder %s31, 3
      %p154 = por %p152, %p153
      %p155 = scmp.ne.s32.totalorder %s147, %s150
      %p156 = scmp.eq.s32.totalorder %s31, 0
      %p157 = por %p155, %p156
      %p158 = scmp.ne.s32.totalorder %s147, %s150
      %p159 = scmp.eq.s32.totalorder %s36, 3
      %p160 = por %p158, %p159
      %p161 = scmp.ne.s32.totalorder %s150, %s151
      %p162 = scmp.eq.s32.totalorder %s36, 0
      %p163 = por %p161, %p162
      %p164 = scmp.ne.s32.totalorder %s150, %s151
      %p165 = scmp.eq.s32.totalorder %s37, 3
      %p166 = por %p164, %p165
      %p168 = scmp.ne.s32.totalorder %s151, %s167
      %p169 = scmp.eq.s32.totalorder %s37, 0
      %p170 = por %p168, %p169
      %s171 = ssub.s32 %s39, %s46
      %p172 = scmp.eq.s32.totalorder %s171, 0
      %s174 = sadd.s32 %s173, 1
      %s175 = scalar_select %p172, %s173, %s174
      %p178 = pneg %p172
      %p179 = scmp.eq.s32.totalorder %s31, 3
      %p180 = por %p178, %p179
      %p181 = scmp.ne.s32.totalorder %s173, %s176
      %p182 = scmp.eq.s32.totalorder %s31, 0
      %p183 = por %p181, %p182
      %p184 = scmp.ne.s32.totalorder %s173, %s176
      %p185 = scmp.eq.s32.totalorder %s36, 3
      %p186 = por %p184, %p185
      %p187 = scmp.ne.s32.totalorder %s176, %s177
      %p188 = scmp.eq.s32.totalorder %s36, 0
      %p189 = por %p187, %p188
      %p190 = scmp.ne.s32.totalorder %s176, %s177
      %p191 = scmp.eq.s32.totalorder %s37, 3
      %p192 = por %p190, %p191
      %p194 = scmp.ne.s32.totalorder %s177, %s193
      %p195 = scmp.eq.s32.totalorder %s37, 0
      %p196 = por %p194, %p195
      %s197 = ssub.s32 %s39, %s46
      %p198 = scmp.eq.s32.totalorder %s197, 0
      %s200 = sadd.s32 %s199, 1
      %s201 = scalar_select %p198, %s199, %s200
      %p204 = pneg %p198
      %p205 = scmp.eq.s32.totalorder %s31, 3
      %p206 = por %p204, %p205
      %p207 = scmp.ne.s32.totalorder %s199, %s202
      %p208 = scmp.eq.s32.totalorder %s31, 0
      %p209 = por %p207, %p208
      %p210 = scmp.ne.s32.totalorder %s199, %s202
      %p211 = scmp.eq.s32.totalorder %s36, 3
      %p212 = por %p210, %p211
      %p213 = scmp.ne.s32.totalorder %s202, %s203
      %p214 = scmp.eq.s32.totalorder %s36, 0
      %p215 = por %p213, %p214
      %p216 = scmp.ne.s32.totalorder %s202, %s203
      %p217 = scmp.eq.s32.totalorder %s37, 3
      %p218 = por %p216, %p217
      %p220 = scmp.ne.s32.totalorder %s203, %s219
      %p221 = scmp.eq.s32.totalorder %s37, 0
      %p222 = por %p220, %p221
      %s223 = ssub.s32 %s39, %s46
      %p224 = scmp.eq.s32.totalorder %s223, 0
      %s226 = sadd.s32 %s225, 1
      %s227 = scalar_select %p224, %s225, %s226
      %p230 = pneg %p224
      %p231 = scmp.eq.s32.totalorder %s31, 3
      %p232 = por %p230, %p231
      %p233 = scmp.ne.s32.totalorder %s225, %s228
      %p234 = scmp.eq.s32.totalorder %s31, 0
      %p235 = por %p233, %p234
      %p236 = scmp.ne.s32.totalorder %s225, %s228
      %p237 = scmp.eq.s32.totalorder %s36, 3
      %p238 = por %p236, %p237
      %p239 = scmp.ne.s32.totalorder %s228, %s229
      %p240 = scmp.eq.s32.totalorder %s36, 0
      %p241 = por %p239, %p240
      %p242 = scmp.ne.s32.totalorder %s228, %s229
      %p243 = scmp.eq.s32.totalorder %s37, 3
      %p244 = por %p242, %p243
      %p246 = scmp.ne.s32.totalorder %s229, %s245
      %p247 = scmp.eq.s32.totalorder %s37, 0
      %p248 = por %p246, %p247
      %s249 = ssub.s32 %s39, %s46
      %p250 = scmp.eq.s32.totalorder %s249, 0
      %s252 = sadd.s32 %s251, 1
      %s253 = scalar_select %p250, %s251, %s252
      %p256 = pneg %p250
      %p257 = scmp.eq.s32.totalorder %s31, 3
      %p258 = por %p256, %p257
      %p259 = scmp.ne.s32.totalorder %s251, %s254
      %p260 = scmp.eq.s32.totalorder %s31, 0
      %p261 = por %p259, %p260
      %p262 = scmp.ne.s32.totalorder %s251, %s254
      %p263 = scmp.eq.s32.totalorder %s36, 3
      %p264 = por %p262, %p263
      %p265 = scmp.ne.s32.totalorder %s254, %s255
      %p266 = scmp.eq.s32.totalorder %s36, 0
      %p267 = por %p265, %p266
      %p268 = scmp.ne.s32.totalorder %s254, %s255
      %p269 = scmp.eq.s32.totalorder %s37, 3
      %p270 = por %p268, %p269
      %p272 = scmp.ne.s32.totalorder %s255, %s271
      %p273 = scmp.eq.s32.totalorder %s37, 0
      %p274 = por %p272, %p273
      %s275 = ssub.s32 %s39, %s46
      %p276 = scmp.eq.s32.totalorder %s275, 0
      %s278 = sadd.s32 %s277, 1
      %s279 = scalar_select %p276, %s277, %s278
      %p282 = pneg %p276
      %p283 = scmp.eq.s32.totalorder %s31, 3
      %p284 = por %p282, %p283
      %p285 = scmp.ne.s32.totalorder %s277, %s280
      %p286 = scmp.eq.s32.totalorder %s31, 0
      %p287 = por %p285, %p286
      %p288 = scmp.ne.s32.totalorder %s277, %s280
      %p289 = scmp.eq.s32.totalorder %s36, 3
      %p290 = por %p288, %p289
      %p291 = scmp.ne.s32.totalorder %s280, %s281
      %p292 = scmp.eq.s32.totalorder %s36, 0
      %p293 = por %p291, %p292
      %p294 = scmp.ne.s32.totalorder %s280, %s281
      %p295 = scmp.eq.s32.totalorder %s37, 3
      %p296 = por %p294, %p295
      %p298 = scmp.ne.s32.totalorder %s281, %s297
      %p299 = scmp.eq.s32.totalorder %s37, 0
      %p300 = por %p298, %p299
      %s301 = ssub.s32 %s39, %s46
      %p302 = scmp.eq.s32.totalorder %s301, 0
      %s304 = sadd.s32 %s303, 1
      %s305 = scalar_select %p302, %s303, %s304
      %p308 = pneg %p302
      %p309 = scmp.eq.s32.totalorder %s31, 3
      %p310 = por %p308, %p309
      %p311 = scmp.ne.s32.totalorder %s303, %s306
      %p312 = scmp.eq.s32.totalorder %s31, 0
      %p313 = por %p311, %p312
      %p314 = scmp.ne.s32.totalorder %s303, %s306
      %p315 = scmp.eq.s32.totalorder %s36, 3
      %p316 = por %p314, %p315
      %p317 = scmp.ne.s32.totalorder %s306, %s307
      %p318 = scmp.eq.s32.totalorder %s36, 0
      %p319 = por %p317, %p318
      %p320 = scmp.ne.s32.totalorder %s306, %s307
      %p321 = scmp.eq.s32.totalorder %s37, 3
      %p322 = por %p320, %p321
      %p324 = scmp.ne.s32.totalorder %s307, %s323
      %p325 = scmp.eq.s32.totalorder %s37, 0
      %p326 = por %p324, %p325
      %s327 = ssub.s32 %s39, %s46
      %p328 = scmp.eq.s32.totalorder %s327, 0
      %s330 = sadd.s32 %s329, 1
      %s331 = scalar_select %p328, %s329, %s330
      %p334 = pneg %p328
      %p335 = scmp.eq.s32.totalorder %s31, 3
      %p336 = por %p334, %p335
      %p337 = scmp.ne.s32.totalorder %s329, %s332
      %p338 = scmp.eq.s32.totalorder %s31, 0
      %p339 = por %p337, %p338
      %p340 = scmp.ne.s32.totalorder %s329, %s332
      %p341 = scmp.eq.s32.totalorder %s36, 3
      %p342 = por %p340, %p341
      %p343 = scmp.ne.s32.totalorder %s332, %s333
      %p344 = scmp.eq.s32.totalorder %s36, 0
      %p345 = por %p343, %p344
      %p346 = scmp.ne.s32.totalorder %s332, %s333
      %p347 = scmp.eq.s32.totalorder %s37, 3
      %p348 = por %p346, %p347
      %p350 = scmp.ne.s32.totalorder %s333, %s349
      %p351 = scmp.eq.s32.totalorder %s37, 0
      %p352 = por %p350, %p351
      %s353 = ssub.s32 %s39, %s46
      %p354 = scmp.eq.s32.totalorder %s353, 0
      %s356 = sadd.s32 %s355, 1
      %s357 = scalar_select %p354, %s355, %s356
      %p360 = pneg %p354
      %p361 = scmp.eq.s32.totalorder %s31, 3
      %p362 = por %p360, %p361
      %p363 = scmp.ne.s32.totalorder %s355, %s358
      %p364 = scmp.eq.s32.totalorder %s31, 0
      %p365 = por %p363, %p364
      %p366 = scmp.ne.s32.totalorder %s355, %s358
      %p367 = scmp.eq.s32.totalorder %s36, 3
      %p368 = por %p366, %p367
      %p369 = scmp.ne.s32.totalorder %s358, %s359
      %p370 = scmp.eq.s32.totalorder %s36, 0
      %p371 = por %p369, %p370
      %p372 = scmp.ne.s32.totalorder %s358, %s359
      %p373 = scmp.eq.s32.totalorder %s37, 3
      %p374 = por %p372, %p373
      %p376 = scmp.ne.s32.totalorder %s359, %s375
      %p377 = scmp.eq.s32.totalorder %s37, 0
      %p378 = por %p376, %p377
      %s379 = ssub.s32 %s39, %s46
      %p380 = scmp.eq.s32.totalorder %s379, 0
      %s382 = sadd.s32 %s381, 1
      %s383 = scalar_select %p380, %s381, %s382
      %p386 = pneg %p380
      %p387 = scmp.eq.s32.totalorder %s31, 3
      %p388 = por %p386, %p387
      %p389 = scmp.ne.s32.totalorder %s381, %s384
      %p390 = scmp.eq.s32.totalorder %s31, 0
      %p391 = por %p389, %p390
      %p392 = scmp.ne.s32.totalorder %s381, %s384
      %p393 = scmp.eq.s32.totalorder %s36, 3
      %p394 = por %p392, %p393
      %p395 = scmp.ne.s32.totalorder %s384, %s385
      %p396 = scmp.eq.s32.totalorder %s36, 0
      %p397 = por %p395, %p396
      %p398 = scmp.ne.s32.totalorder %s384, %s385
      %p399 = scmp.eq.s32.totalorder %s37, 3
      %p400 = por %p398, %p399
      %p402 = scmp.ne.s32.totalorder %s385, %s401
      %p403 = scmp.eq.s32.totalorder %s37, 0
      %p404 = por %p402, %p403
      %s405 = ssub.s32 %s39, %s46
      %p406 = scmp.eq.s32.totalorder %s405, 0
      %s408 = sadd.s32 %s407, 1
      %s409 = scalar_select %p406, %s407, %s408
      %p412 = pneg %p406
      %p413 = scmp.eq.s32.totalorder %s31, 3
      %p414 = por %p412, %p413
      %p415 = scmp.ne.s32.totalorder %s407, %s410
      %p416 = scmp.eq.s32.totalorder %s31, 0
      %p417 = por %p415, %p416
      %p418 = scmp.ne.s32.totalorder %s407, %s410
      %p419 = scmp.eq.s32.totalorder %s36, 3
      %p420 = por %p418, %p419
      %p421 = scmp.ne.s32.totalorder %s410, %s411
      %p422 = scmp.eq.s32.totalorder %s36, 0
      %p423 = por %p421, %p422
      %p424 = scmp.ne.s32.totalorder %s410, %s411
      %p425 = scmp.eq.s32.totalorder %s37, 3
      %p426 = por %p424, %p425
      %p428 = scmp.ne.s32.totalorder %s411, %s427
      %p429 = scmp.eq.s32.totalorder %s37, 0
      %p430 = por %p428, %p429
      %s431 = ssub.s32 %s39, %s46
      %p432 = scmp.eq.s32.totalorder %s431, 0
      %s434 = sadd.s32 %s433, 1
      %s435 = scalar_select %p432, %s433, %s434
      %p438 = pneg %p432
      %p439 = scmp.eq.s32.totalorder %s31, 3
      %p440 = por %p438, %p439
      %p441 = scmp.ne.s32.totalorder %s433, %s436
      %p442 = scmp.eq.s32.totalorder %s31, 0
      %p443 = por %p441, %p442
      %p444 = scmp.ne.s32.totalorder %s433, %s436
      %p445 = scmp.eq.s32.totalorder %s36, 3
      %p446 = por %p444, %p445
      %p447 = scmp.ne.s32.totalorder %s436, %s437
      %p448 = scmp.eq.s32.totalorder %s36, 0
      %p449 = por %p447, %p448
      %p450 = scmp.ne.s32.totalorder %s436, %s437
      %p451 = scmp.eq.s32.totalorder %s37, 3
      %p452 = por %p450, %p451
      %p454 = scmp.ne.s32.totalorder %s437, %s453
      %p455 = scmp.eq.s32.totalorder %s37, 0
      %p456 = por %p454, %p455
      %s457 = ssub.s32 %s38, %s50
      %p458 = scmp.eq.s32.totalorder %s457, 0
      %s460 = sadd.s32 %s459, 1
      %s461 = scalar_select %p458, %s459, %s460
      %p464 = pneg %p458
      %p465 = scmp.eq.s32.totalorder %s31, 3
      %p466 = por %p464, %p465
      %p467 = scmp.ne.s32.totalorder %s459, %s462
      %p468 = scmp.eq.s32.totalorder %s31, 0
      %p469 = por %p467, %p468
      %p470 = scmp.ne.s32.totalorder %s459, %s462
      %p471 = scmp.eq.s32.totalorder %s36, 3
      %p472 = por %p470, %p471
      %p473 = scmp.ne.s32.totalorder %s462, %s463
      %p474 = scmp.eq.s32.totalorder %s36, 0
      %p475 = por %p473, %p474
      %p476 = scmp.ne.s32.totalorder %s462, %s463
      %p477 = scmp.eq.s32.totalorder %s37, 3
      %p478 = por %p476, %p477
      %p480 = scmp.ne.s32.totalorder %s463, %s479
      %p481 = scmp.eq.s32.totalorder %s37, 0
      %p482 = por %p480, %p481
      %p483 = scmp.le.s32.totalorder 1, %s31
      %p484 = scmp.lt.s32.totalorder %s31, 5
      %p485 = pnand %p483, %p484
      %p486 = pneg %p485
      // Predicated region
      $region9: #{_lambda_.1} parent=5 // pred_check
        _
      $region10: #{_lambda_.1} parent=5 // pred_check_branch
        %488 = sbr.rel (%p485) target = $region12
      $region11: #{_lambda_.1} parent=5 // pred_region
        %s489 = ssub.s32 %s31, 1
        // Predicated region
        $region13: #{_lambda_.1} parent=11 // pred_check
          %p490 = pneg %p116
        $region14: #{_lambda_.1} parent=11 // pred_check_branch
          %492 = sbr.rel (%p490) target = $region16
        $region15: #{_lambda_.1} parent=11 // pred_region
          _
        $region16: #{_lambda_.1} parent=11 // pred_fallthru
          _
        // Predicated region
        $region17: #{_lambda_.1} parent=11 // pred_check
          %p493 = pneg %p137
        $region18: #{_lambda_.1} parent=11 // pred_check_branch
          %495 = sbr.rel (%p493) target = $region20
        $region19: #{_lambda_.1} parent=11 // pred_region
          _
        $region20: #{_lambda_.1} parent=11 // pred_fallthru
          _
      $region12: #{_lambda_.1} parent=5 // pred_fallthru
        _
      %p496 = scmp.lt.s32.totalorder %s31, 4
      // Predicated region
      $region21: #{_lambda_.1} parent=5 // pred_check
        %p497 = pneg %p496
      $region22: #{_lambda_.1} parent=5 // pred_check_branch
        %499 = sbr.rel (%p497) target = $region24
      $region23: #{_lambda_.1} parent=5 // pred_region
        // Predicated region
        $region25: #{_lambda_.1} parent=23 // pred_check
          %p500 = pneg %p63
        $region26: #{_lambda_.1} parent=23 // pred_check_branch
          %502 = sbr.rel (%p500) target = $region28
        $region27: #{_lambda_.1} parent=23 // pred_region
          %p503 = scmp.lt.s32.totalorder %s38, 1
          %s504 = scalar_select %p503, %s38, 1
          %s505 = smul.addr %s504, 8
          %s506 = scalar_lea.vmem %s0, %s505
        $region28: #{_lambda_.1} parent=23 // pred_fallthru
          _
        // Predicated region
        $region29: #{_lambda_.1} parent=23 // pred_check
          %p507 = pneg %p89
        $region30: #{_lambda_.1} parent=23 // pred_check_branch
          %509 = sbr.rel (%p507) target = $region32
        $region31: #{_lambda_.1} parent=23 // pred_region
          %p510 = scmp.lt.s32.totalorder %s38, 1
          %s511 = scalar_select %p510, %s38, 1
          %s512 = scalar_lea.vmem %s1, %s511
        $region32: #{_lambda_.1} parent=23 // pred_fallthru
          _
        // Predicated region
        $region33: #{_lambda_.1} parent=23 // pred_check
          %p513 = pneg %p157
        $region34: #{_lambda_.1} parent=23 // pred_check_branch
          %515 = sbr.rel (%p513) target = $region36
        $region35: #{_lambda_.1} parent=23 // pred_region
          %s516 = sand.u32 %s147, 1
          %s517 = scalar_lea.sflag [#allocation4], %s516
          %s518 = sand.u32 %s147, 1
          %s519 = smul.addr %s518, 384
          %s520 = scalar_lea.vmem [#allocation3], %s519
          %522 = vsyncadd %s517, 0
          %s523 = smul.addr %s39, 48
          %s524 = smul.addr %s523, 8
          %s525 = scalar_lea.hbm %s4, %s524
          %s526 = sshll.u32 %s525, 4
          %s527 = int_to_ptr.hbm [resolvable:$true] %s526
          %s528 = sshll.u32 %s520, 4
          %s529 = int_to_ptr.vmem [resolvable:$true] %s528
          %534 = dma.hbm_to_vmem [thread:$0]  %s527, 6144, %s529, %s517, 384, 384, 24
        $region36: #{_lambda_.1} parent=23 // pred_fallthru
          _
        // Predicated region
        $region37: #{_lambda_.1} parent=23 // pred_check
          %p535 = pneg %p183
        $region38: #{_lambda_.1} parent=23 // pred_check_branch
          %537 = sbr.rel (%p535) target = $region40
        $region39: #{_lambda_.1} parent=23 // pred_region
          %p538 = scmp.lt.s32.totalorder %s39, 1
          %s539 = scalar_select %p538, %s39, 1
          %s540 = smul.addr %s539, 3
          %s541 = scalar_lea.vmem %s5, %s540
        $region40: #{_lambda_.1} parent=23 // pred_fallthru
          _
        // Predicated region
        $region41: #{_lambda_.1} parent=23 // pred_check
          %p542 = pneg %p209
        $region42: #{_lambda_.1} parent=23 // pred_check_branch
          %544 = sbr.rel (%p542) target = $region44
        $region43: #{_lambda_.1} parent=23 // pred_region
          %s545 = sand.u32 %s31, 1
          %s546 = scalar_lea.sflag [#allocation6], %s545
          %s547 = sand.u32 %s199, 1
          %s548 = smul.addr %s547, 128
          %s549 = scalar_lea.vmem [#allocation5], %s548
          %551 = vsyncadd %s546, 0
          %s552 = smul.addr %s39, 16
          %s553 = smul.addr %s552, 8
          %s554 = scalar_lea.hbm %s6, %s553
          %s555 = sshll.u32 %s554, 4
          %s556 = int_to_ptr.hbm [resolvable:$true] %s555
          %s557 = sshll.u32 %s549, 4
          %s558 = int_to_ptr.vmem [resolvable:$true] %s557
          %563 = dma.hbm_to_vmem [thread:$0]  %s556, 2048, %s558, %s546, 128, 128, 8
        $region44: #{_lambda_.1} parent=23 // pred_fallthru
          _
        // Predicated region
        $region45: #{_lambda_.1} parent=23 // pred_check
          %p564 = pneg %p235
        $region46: #{_lambda_.1} parent=23 // pred_check_branch
          %566 = sbr.rel (%p564) target = $region48
        $region47: #{_lambda_.1} parent=23 // pred_region
          %p567 = scmp.lt.s32.totalorder %s39, 1
          %s568 = scalar_select %p567, %s39, 1
          %s569 = scalar_lea.vmem %s7, %s568
        $region48: #{_lambda_.1} parent=23 // pred_fallthru
          _
        // Predicated region
        $region49: #{_lambda_.1} parent=23 // pred_check
          %p570 = pneg %p261
        $region50: #{_lambda_.1} parent=23 // pred_check_branch
          %572 = sbr.rel (%p570) target = $region52
        $region51: #{_lambda_.1} parent=23 // pred_region
          %p573 = scmp.lt.s32.totalorder %s39, 1
          %s574 = scalar_select %p573, %s39, 1
          %s575 = scalar_lea.vmem %s8, %s574
        $region52: #{_lambda_.1} parent=23 // pred_fallthru
          _
        // Predicated region
        $region53: #{_lambda_.1} parent=23 // pred_check
          %p576 = pneg %p287
        $region54: #{_lambda_.1} parent=23 // pred_check_branch
          %578 = sbr.rel (%p576) target = $region56
        $region55: #{_lambda_.1} parent=23 // pred_region
          %p579 = scmp.lt.s32.totalorder %s39, 1
          %s580 = scalar_select %p579, %s39, 1
          %s581 = scalar_lea.vmem %s9, %s580
        $region56: #{_lambda_.1} parent=23 // pred_fallthru
          _
        // Predicated region
        $region57: #{_lambda_.1} parent=23 // pred_check
          %p582 = pneg %p313
        $region58: #{_lambda_.1} parent=23 // pred_check_branch
          %584 = sbr.rel (%p582) target = $region60
        $region59: #{_lambda_.1} parent=23 // pred_region
          %s585 = sand.u32 %s31, 1
          %s586 = scalar_lea.sflag [#allocation6], %s585
          %s587 = sand.u32 %s303, 1
          %s588 = smul.addr %s587, 128
          %s589 = scalar_lea.vmem [#allocation7], %s588
          %591 = vsyncadd %s586, 0
          %s592 = smul.addr %s39, 16
          %s593 = smul.addr %s592, 8
          %s594 = scalar_lea.hbm %s10, %s593
          %s595 = sshll.u32 %s594, 4
          %s596 = int_to_ptr.hbm [resolvable:$true] %s595
          %s597 = sshll.u32 %s589, 4
          %s598 = int_to_ptr.vmem [resolvable:$true] %s597
          %603 = dma.hbm_to_vmem [thread:$0]  %s596, 2048, %s598, %s586, 128, 128, 8
        $region60: #{_lambda_.1} parent=23 // pred_fallthru
          _
        // Predicated region
        $region61: #{_lambda_.1} parent=23 // pred_check
          %p604 = pneg %p339
        $region62: #{_lambda_.1} parent=23 // pred_check_branch
          %606 = sbr.rel (%p604) target = $region64
        $region63: #{_lambda_.1} parent=23 // pred_region
          %p607 = scmp.lt.s32.totalorder %s39, 1
          %s608 = scalar_select %p607, %s39, 1
          %s609 = scalar_lea.vmem %s11, %s608
        $region64: #{_lambda_.1} parent=23 // pred_fallthru
          _
        // Predicated region
        $region65: #{_lambda_.1} parent=23 // pred_check
          %p610 = pneg %p365
        $region66: #{_lambda_.1} parent=23 // pred_check_branch
          %612 = sbr.rel (%p610) target = $region68
        $region67: #{_lambda_.1} parent=23 // pred_region
          %s613 = sand.u32 %s355, 1
          %s614 = scalar_lea.sflag [#allocation9], %s613
          %s615 = sand.u32 %s355, 1
          %s616 = smul.addr %s615, 128
          %s617 = scalar_lea.vmem [#allocation8], %s616
          %619 = vsyncadd %s614, 0
          %s620 = smul.addr %s39, 16
          %s621 = smul.addr %s620, 8
          %s622 = scalar_lea.hbm %s12, %s621
          %s623 = sshll.u32 %s622, 4
          %s624 = int_to_ptr.hbm [resolvable:$true] %s623
          %s625 = sshll.u32 %s617, 4
          %s626 = int_to_ptr.vmem [resolvable:$true] %s625
          %631 = dma.hbm_to_vmem [thread:$0]  %s624, 2048, %s626, %s614, 128, 128, 8
        $region68: #{_lambda_.1} parent=23 // pred_fallthru
          _
        // Predicated region
        $region69: #{_lambda_.1} parent=23 // pred_check
          %p632 = pneg %p391
        $region70: #{_lambda_.1} parent=23 // pred_check_branch
          %634 = sbr.rel (%p632) target = $region72
        $region71: #{_lambda_.1} parent=23 // pred_region
          %p635 = scmp.lt.s32.totalorder %s39, 1
          %s636 = scalar_select %p635, %s39, 1
          %s637 = scalar_lea.vmem %s13, %s636
        $region72: #{_lambda_.1} parent=23 // pred_fallthru
          _
        // Predicated region
        $region73: #{_lambda_.1} parent=23 // pred_check
          %p638 = pneg %p417
        $region74: #{_lambda_.1} parent=23 // pred_check_branch
          %640 = sbr.rel (%p638) target = $region76
        $region75: #{_lambda_.1} parent=23 // pred_region
          %p641 = scmp.lt.s32.totalorder %s39, 1
          %s642 = scalar_select %p641, %s39, 1
          %s643 = scalar_lea.vmem %s14, %s642
        $region76: #{_lambda_.1} parent=23 // pred_fallthru
          _
        // Predicated region
        $region77: #{_lambda_.1} parent=23 // pred_check
          %p644 = pneg %p443
        $region78: #{_lambda_.1} parent=23 // pred_check_branch
          %646 = sbr.rel (%p644) target = $region80
        $region79: #{_lambda_.1} parent=23 // pred_region
          %p647 = scmp.lt.s32.totalorder %s39, 1
          %s648 = scalar_select %p647, %s39, 1
          %s649 = scalar_lea.vmem %s15, %s648
        $region80: #{_lambda_.1} parent=23 // pred_fallthru
          _
      $region24: #{_lambda_.1} parent=5 // pred_fallthru
        _
      %p650 = scmp.le.s32.totalorder 1, %s31
      %p651 = scmp.lt.s32.totalorder %s31, 5
      %p652 = pnand %p650, %p651
      %p653 = pneg %p652
      // Predicated region
      $region81: #{_lambda_.1} parent=5 // pred_check
        _
      $region82: #{_lambda_.1} parent=5 // pred_check_branch
        %655 = sbr.rel (%p652) target = $region84
      $region83: #{_lambda_.1} parent=5 // pred_region
        %s656 = ssub.s32 %s31, 1
        %s657 = sand.u32 %s150, 1
        %s658 = scalar_lea.sflag [#allocation4], %s657
        %s659 = sand.u32 %s150, 1
        %s660 = smul.addr %s659, 384
        %s661 = scalar_lea.vmem [#allocation3], %s660
        // Predicated region
        $region85: #{_lambda_.1} parent=83 // pred_check
          %p662 = pneg %p163
        $region86: #{_lambda_.1} parent=83 // pred_check_branch
          %664 = sbr.rel (%p662) target = $region88
        $region87: #{_lambda_.1} parent=83 // pred_region
          %666 = dma.done %s658, 6144
        $region88: #{_lambda_.1} parent=83 // pred_fallthru
          _
        %s667 = sand.u32 %s36, 1
        %s668 = scalar_lea.sflag [#allocation6], %s667
        %s669 = sand.u32 %s202, 1
        %s670 = smul.addr %s669, 128
        %s671 = scalar_lea.vmem [#allocation5], %s670
        // Predicated region
        $region89: #{_lambda_.1} parent=83 // pred_check
          %p672 = pneg %p215
        $region90: #{_lambda_.1} parent=83 // pred_check_branch
          %674 = sbr.rel (%p672) target = $region92
        $region91: #{_lambda_.1} parent=83 // pred_region
          %676 = dma.done %s668, 2048
        $region92: #{_lambda_.1} parent=83 // pred_fallthru
          _
        %s677 = sand.u32 %s36, 1
        %s678 = scalar_lea.sflag [#allocation6], %s677
        %s679 = sand.u32 %s306, 1
        %s680 = smul.addr %s679, 128
        %s681 = scalar_lea.vmem [#allocation7], %s680
        // Predicated region
        $region93: #{_lambda_.1} parent=83 // pred_check
          %p682 = pneg %p319
        $region94: #{_lambda_.1} parent=83 // pred_check_branch
          %684 = sbr.rel (%p682) target = $region96
        $region95: #{_lambda_.1} parent=83 // pred_region
          %686 = dma.done %s678, 2048
        $region96: #{_lambda_.1} parent=83 // pred_fallthru
          _
        %s687 = sand.u32 %s358, 1
        %s688 = scalar_lea.sflag [#allocation9], %s687
        %s689 = sand.u32 %s358, 1
        %s690 = smul.addr %s689, 128
        %s691 = scalar_lea.vmem [#allocation8], %s690
        // Predicated region
        $region97: #{_lambda_.1} parent=83 // pred_check
          %p692 = pneg %p371
        $region98: #{_lambda_.1} parent=83 // pred_check_branch
          %694 = sbr.rel (%p692) target = $region100
        $region99: #{_lambda_.1} parent=83 // pred_region
          %696 = dma.done %s688, 2048
        $region100: #{_lambda_.1} parent=83 // pred_fallthru
          _
        %p697 = scmp.lt.s32.totalorder %s40, 1
        %s698 = scalar_select %p697, %s40, 1
        %s699 = smul.addr %s698, 8
        %s700 = scalar_lea.vmem %s0, %s699
        %p701 = pneg %p69
        %p702 = pneg %p66
        %p703 = scmp.lt.s32.totalorder %s40, 1
        %s704 = scalar_select %p703, %s40, 1
        %s705 = scalar_lea.vmem %s1, %s704
        %p706 = pneg %p95
        %p707 = pneg %p92
        %p708 = pneg %p116
        %p709 = pneg %p113
        %p710 = pneg %p137
        %p711 = pneg %p134
        %s712 = sand.u32 %s150, 1
        %s713 = scalar_lea.sflag [#allocation4], %s712
        %s714 = sand.u32 %s150, 1
        %s715 = smul.addr %s714, 384
        %s716 = scalar_lea.vmem [#allocation3], %s715
        %p717 = pneg %p163
        %p718 = pneg %p160
        %p719 = scmp.lt.s32.totalorder %s41, 1
        %s720 = scalar_select %p719, %s41, 1
        %s721 = smul.addr %s720, 3
        %s722 = scalar_lea.vmem %s5, %s721
        %p723 = pneg %p189
        %p724 = pneg %p186
        %s725 = sand.u32 %s36, 1
        %s726 = scalar_lea.sflag [#allocation6], %s725
        %s727 = sand.u32 %s202, 1
        %s728 = smul.addr %s727, 128
        %s729 = scalar_lea.vmem [#allocation5], %s728
        %p730 = pneg %p215
        %p731 = pneg %p212
        %p732 = scmp.lt.s32.totalorder %s41, 1
        %s733 = scalar_select %p732, %s41, 1
        %s734 = scalar_lea.vmem %s7, %s733
        %p735 = pneg %p241
        %p736 = pneg %p238
        %p737 = scmp.lt.s32.totalorder %s41, 1
        %s738 = scalar_select %p737, %s41, 1
        %s739 = scalar_lea.vmem %s8, %s738
        %p740 = pneg %p267
        %p741 = pneg %p264
        %p742 = scmp.lt.s32.totalorder %s41, 1
        %s743 = scalar_select %p742, %s41, 1
        %s744 = scalar_lea.vmem %s9, %s743
        %p745 = pneg %p293
        %p746 = pneg %p290
        %s747 = sand.u32 %s36, 1
        %s748 = scalar_lea.sflag [#allocation6], %s747
        %s749 = sand.u32 %s306, 1
        %s750 = smul.addr %s749, 128
        %s751 = scalar_lea.vmem [#allocation7], %s750
        %p752 = pneg %p319
        %p753 = pneg %p316
        %p754 = scmp.lt.s32.totalorder %s41, 1
        %s755 = scalar_select %p754, %s41, 1
        %s756 = scalar_lea.vmem %s11, %s755
        %p757 = pneg %p345
        %p758 = pneg %p342
        %s759 = sand.u32 %s358, 1
        %s760 = scalar_lea.sflag [#allocation9], %s759
        %s761 = sand.u32 %s358, 1
        %s762 = smul.addr %s761, 128
        %s763 = scalar_lea.vmem [#allocation8], %s762
        %p764 = pneg %p371
        %p765 = pneg %p368
        %p766 = scmp.lt.s32.totalorder %s41, 1
        %s767 = scalar_select %p766, %s41, 1
        %s768 = scalar_lea.vmem %s13, %s767
        %p769 = pneg %p397
        %p770 = pneg %p394
        %p771 = scmp.lt.s32.totalorder %s41, 1
        %s772 = scalar_select %p771, %s41, 1
        %s773 = scalar_lea.vmem %s14, %s772
        %p774 = pneg %p423
        %p775 = pneg %p420
        %p776 = scmp.lt.s32.totalorder %s41, 1
        %s777 = scalar_select %p776, %s41, 1
        %s778 = scalar_lea.vmem %s15, %s777
        %p779 = pneg %p449
        %p780 = pneg %p446
        %p781 = pneg %p475
        %p782 = pneg %p472
        %p783 = scmp.lt.s32.totalorder %s40, 1
        %s784 = scalar_select %p783, %s40, 1
        %s785 = smul.addr %s784, 8
        %s786 = scalar_lea.vmem %s16, %s785
        %p787 = scmp.lt.s32.totalorder %s40, 1
        %s788 = scalar_select %p787, %s40, 1
        %s789 = smul.addr %s788, 8
        %s790 = scalar_lea.vmem %s0, %s789
        %p791 = scmp.lt.s32.totalorder %s40, 1
        %s792 = scalar_select %p791, %s40, 1
        %s793 = scalar_lea.vmem %s1, %s792
        %p794 = scmp.lt.s32.totalorder %s41, 1
        %s795 = scalar_select %p794, %s41, 1
        %s796 = smul.addr %s795, 3
        %s797 = scalar_lea.vmem %s5, %s796
        %p798 = scmp.lt.s32.totalorder %s41, 1
        %s799 = scalar_select %p798, %s41, 1
        %s800 = scalar_lea.vmem %s7, %s799
        %p801 = scmp.lt.s32.totalorder %s41, 1
        %s802 = scalar_select %p801, %s41, 1
        %s803 = scalar_lea.vmem %s8, %s802
        %p804 = scmp.lt.s32.totalorder %s41, 1
        %s805 = scalar_select %p804, %s41, 1
        %s806 = scalar_lea.vmem %s9, %s805
        %p807 = scmp.lt.s32.totalorder %s41, 1
        %s808 = scalar_select %p807, %s41, 1
        %s809 = scalar_lea.vmem %s11, %s808
        %p810 = scmp.lt.s32.totalorder %s41, 1
        %s811 = scalar_select %p810, %s41, 1
        %s812 = scalar_lea.vmem %s13, %s811
        %p813 = scmp.lt.s32.totalorder %s41, 1
        %s814 = scalar_select %p813, %s41, 1
        %s815 = scalar_lea.vmem %s14, %s814
        %p816 = scmp.lt.s32.totalorder %s41, 1
        %s817 = scalar_select %p816, %s41, 1
        %s818 = scalar_lea.vmem %s15, %s817
        %p819 = scmp.lt.s32.totalorder %s40, 1
        %s820 = scalar_select %p819, %s40, 1
        %s821 = smul.addr %s820, 8
        %s822 = scalar_lea.vmem %s16, %s821
        %v823 = vlaneseq
        %v824 = vand.u32 %v823, 127
        %vm825 = vcmp.lt.s32.totalorder %v824, 32
        %p826 = scmp.eq.s32.totalorder %s41, 0
        // Predicated region
        $region101: #{_lambda_.1} parent=83 // pred_check
          %p827 = pneg %p826
        $region102: #{_lambda_.1} parent=83 // pred_check_branch
          %829 = sbr.rel (%p827) target = $region104
        $region103: #{_lambda_.1} parent=83 // pred_region
          %v830 = vld [vmem:[%s790] sm:$0xff]
          %v831 = vld [vmem:[%s2] sm:$0x1]
          %v832 = vld [vmem:[%s3] sm:$0x1]
          %833 = vadd.xlane.f32.xlu0 %v830
          %v834 = vpop.xlane.xlu0 %833
          %v835 = vmul.f32 %v834, 0.03125
          %v836 = vsub.f32 %v830, %v835
          %v837 = vsel %vm825, 1, 0
          %vm838 = vcmp.eq.s32.totalorder %v837, 1
          %v839 = vsel %vm838, %v836, 0.0
          %v840 = vmul.f32 %v839, %v839
          %841 = vadd.xlane.f32.xlu0 %v840
          %v842 = vpop.xlane.xlu0 %841
          %v843 = vmul.f32 %v842, 0.03125
          %v844 = vadd.f32 %v843, 1e-12
          %v845 = vrsqrt.pop %v844
          %v846 = vmul.f32 %v845, %v844
          %v847 = vmul.f32 %v846, %v845
          %v848 = vmul.f32 0.5, %v847
          %v849 = vsub.f32 1.5, %v848
          %v850 = vmul.f32 %v845, %v849
          %vm851 = vweird.f32 %v844
          %vm852 = vweird.f32 %v845
          %vm853 = vmor %vm851, %vm852
          %v854 = vsel %vm853, %v845, %v850
          %v855 = vmul.f32 %v839, %v854
          %v857 = vperm.slane %v831, 0
          %v859 = vmul.f32 %v855, %v857
          %v861 = vperm.slane %v832, 0
          %v863 = vadd.f32 %v859, %v861
          %864 = vst [vmem:[#allocation2] sm:$0xff] %v863
        $region104: #{_lambda_.1} parent=83 // pred_fallthru
          _
        %v865 = vld [vmem:[#allocation2] sm:$0xff]
        %v866 = vld [vmem:[%s793] sm:$0x1]
        %vm867 = vcmp.gt.f32.partialorder %v866, 0.5
        %v868 = vsel %vm867, 0.0, -1e+09
        %v869 = vld [vmem:[%s661] sm:$0xff]
        %v870 = vld [vmem:[%s661 + $0x8] sm:$0xff]
        %v871 = vld [vmem:[%s661 + $0x10] sm:$0xff]
        %v872 = vld [vmem:[%s661 + $0x18] sm:$0xff]
        %v873 = vld [vmem:[%s661 + $0x20] sm:$0xff]
        %v874 = vld [vmem:[%s661 + $0x28] sm:$0xff]
        %v875 = vld [vmem:[%s661 + $0x30] sm:$0xff]
        %v876 = vld [vmem:[%s661 + $0x38] sm:$0xff]
        %v877 = vld [vmem:[%s661 + $0x40] sm:$0xff]
        %v878 = vld [vmem:[%s661 + $0x48] sm:$0xff]
        %v879 = vld [vmem:[%s661 + $0x50] sm:$0xff]
        %v880 = vld [vmem:[%s661 + $0x58] sm:$0xff]
        %v881 = vld [vmem:[%s661 + $0x60] sm:$0xff]
        %v882 = vld [vmem:[%s661 + $0x68] sm:$0xff]
        %v883 = vld [vmem:[%s661 + $0x70] sm:$0xff]
        %v884 = vld [vmem:[%s661 + $0x78] sm:$0xff]
        %v885 = vld [vmem:[%s661 + $0x80] sm:$0xff]
        %v886 = vld [vmem:[%s661 + $0x88] sm:$0xff]
        %v887 = vld [vmem:[%s661 + $0x90] sm:$0xff]
        %v888 = vld [vmem:[%s661 + $0x98] sm:$0xff]
        %v889 = vld [vmem:[%s661 + $0xa0] sm:$0xff]
        %v890 = vld [vmem:[%s661 + $0xa8] sm:$0xff]
        %v891 = vld [vmem:[%s661 + $0xb0] sm:$0xff]
        %v892 = vld [vmem:[%s661 + $0xb8] sm:$0xff]
        %v893 = vld [vmem:[%s661 + $0xc0] sm:$0xff]
        %v894 = vld [vmem:[%s661 + $0xc8] sm:$0xff]
        %v895 = vld [vmem:[%s661 + $0xd0] sm:$0xff]
        %v896 = vld [vmem:[%s661 + $0xd8] sm:$0xff]
        %v897 = vld [vmem:[%s661 + $0xe0] sm:$0xff]
        %v898 = vld [vmem:[%s661 + $0xe8] sm:$0xff]
        %v899 = vld [vmem:[%s661 + $0xf0] sm:$0xff]
        %v900 = vld [vmem:[%s661 + $0xf8] sm:$0xff]
        %v901 = vld [vmem:[%s661 + $0x100] sm:$0xff]
        %v902 = vld [vmem:[%s661 + $0x108] sm:$0xff]
        %v903 = vld [vmem:[%s661 + $0x110] sm:$0xff]
        %v904 = vld [vmem:[%s661 + $0x118] sm:$0xff]
        %v905 = vld [vmem:[%s661 + $0x120] sm:$0xff]
        %v906 = vld [vmem:[%s661 + $0x128] sm:$0xff]
        %v907 = vld [vmem:[%s661 + $0x130] sm:$0xff]
        %v908 = vld [vmem:[%s661 + $0x138] sm:$0xff]
        %v909 = vld [vmem:[%s661 + $0x140] sm:$0xff]
        %v910 = vld [vmem:[%s661 + $0x148] sm:$0xff]
        %v911 = vld [vmem:[%s661 + $0x150] sm:$0xff]
        %v912 = vld [vmem:[%s661 + $0x158] sm:$0xff]
        %v913 = vld [vmem:[%s661 + $0x160] sm:$0xff]
        %v914 = vld [vmem:[%s661 + $0x168] sm:$0xff]
        %v915 = vld [vmem:[%s661 + $0x170] sm:$0xff]
        %v916 = vld [vmem:[%s661 + $0x178] sm:$0xff]
        %v917 = vld [vmem:[%s797] sm:$0x7]
        %v919 = vperm.slane %v917, 0
        %v920 = vperm.slane %v917, 1
        %v921 = vperm.slane %v917, 2
        %925 = vmatpush.msra.mxu0 %v914
        %926 = vmatpush.msra.mxu0 %v911
        %927 = vmatpush.msra.mxu0 %v908
        %928 = vmatpush.msra.mxu0 %v905
        %929 = vmatpush.msra.mxu0 %v902
        %930 = vmatpush.msra.mxu0 %v899
        %931 = vmatpush.msra.mxu0 %v896
        %932 = vmatpush.msra.mxu0 %v893
        %933 = vmatpush.msra.mxu0 %v890
        %934 = vmatpush.msra.mxu0 %v887
        %935 = vmatpush.msra.mxu0 %v884
        %936 = vmatpush.msra.mxu0 %v881
        %937 = vmatpush.msra.mxu0 %v878
        %938 = vmatpush.msra.mxu0 %v875
        %939 = vmatpush.msra.mxu0 %v872
        %940 = vmatpush.msra.mxu0 %v869
        %941 = vmatmul.f32.gmra.mxu0 %v865
        %v942 = vpop.f32.mrf.mxu0
        %v943 = vadd.f32 %v919, %v942
        %944 = vdwg.mxu0
        %945 = vmatpush.msra.mxu0 %v915
        %946 = vmatpush.msra.mxu0 %v912
        %947 = vmatpush.msra.mxu0 %v909
        %948 = vmatpush.msra.mxu0 %v906
        %949 = vmatpush.msra.mxu0 %v903
        %950 = vmatpush.msra.mxu0 %v900
        %951 = vmatpush.msra.mxu0 %v897
        %952 = vmatpush.msra.mxu0 %v894
        %953 = vmatpush.msra.mxu0 %v891
        %954 = vmatpush.msra.mxu0 %v888
        %955 = vmatpush.msra.mxu0 %v885
        %956 = vmatpush.msra.mxu0 %v882
        %957 = vmatpush.msra.mxu0 %v879
        %958 = vmatpush.msra.mxu0 %v876
        %959 = vmatpush.msra.mxu0 %v873
        %960 = vmatpush.msra.mxu0 %v870
        %961 = vmatmul.f32.gmra.mxu0 %v865
        %v962 = vpop.f32.mrf.mxu0
        %v963 = vadd.f32 %v920, %v962
        %964 = vdwg.mxu0
        %965 = vmatpush.msra.mxu0 %v916
        %966 = vmatpush.msra.mxu0 %v913
        %967 = vmatpush.msra.mxu0 %v910
        %968 = vmatpush.msra.mxu0 %v907
        %969 = vmatpush.msra.mxu0 %v904
        %970 = vmatpush.msra.mxu0 %v901
        %971 = vmatpush.msra.mxu0 %v898
        %972 = vmatpush.msra.mxu0 %v895
        %973 = vmatpush.msra.mxu0 %v892
        %974 = vmatpush.msra.mxu0 %v889
        %975 = vmatpush.msra.mxu0 %v886
        %976 = vmatpush.msra.mxu0 %v883
        %977 = vmatpush.msra.mxu0 %v880
        %978 = vmatpush.msra.mxu0 %v877
        %979 = vmatpush.msra.mxu0 %v874
        %980 = vmatpush.msra.mxu0 %v871
        %981 = vmatmul.f32.gmra.mxu0 %v865
        %v982 = vpop.f32.mrf.mxu0
        %v983 = vadd.f32 %v921, %v982
        %984 = vdwg.mxu0
        %v985 = vmul.f32 %v943, 0.25
        %987 = vrot.lane.b32.xlu0 %v985, 64
        %v988 = vpop.permute.xlu0 %987
        %990 = vrot.lane.b32.xlu0 %v963, 64
        %v991 = vpop.permute.xlu0 %990
        %993 = vrot.lane.b32.xlu0 %v983, 64
        %v994 = vpop.permute.xlu0 %993
        %v997 = vperm.slane %v868, 0
        %vm999 = vcmask 523264
        %v1000 = vsel %vm999, %v985, 0
        %v1002 = vsel %vm999, %v963, 0
        %1004 = vmatpush.xpose.msra.mxu0 0.0
        %1005 = vmatpush.xpose.msra.mxu0 0.0
        %1006 = vmatpush.xpose.msra.mxu0 0.0
        %1007 = vmatpush.xpose.msra.mxu0 0.0
        %1008 = vmatpush.xpose.msra.mxu0 0.0
        %1009 = vmatpush.xpose.msra.mxu0 0.0
        %1010 = vmatpush.xpose.msra.mxu0 0.0
        %1011 = vmatpush.xpose.msra.mxu0 0.0
        %1012 = vmatpush.xpose.msra.mxu0 0.0
        %1013 = vmatpush.xpose.msra.mxu0 0.0
        %1014 = vmatpush.xpose.msra.mxu0 0.0
        %1015 = vmatpush.xpose.msra.mxu0 0.0
        %1016 = vmatpush.xpose.msra.mxu0 0.0
        %1017 = vmatpush.xpose.msra.mxu0 0.0
        %1018 = vmatpush.xpose.msra.mxu0 0.0
        %1019 = vmatpush.xpose.msra.mxu0 %v1002
        %1020 = vmatmul.f32.gmra.mxu0 %v1000
        %v1021 = vpop.f32.mrf.mxu0
        %v1022 = vadd.f32 %v997, %v1021
        %1023 = vdwg.mxu0
        %v1024 = vsel %vm999, %v988, 0
        %v1026 = vsel %vm999, %v991, 0
        %1028 = vmatpush.xpose.msra.mxu0 0.0
        %1029 = vmatpush.xpose.msra.mxu0 0.0
        %1030 = vmatpush.xpose.msra.mxu0 0.0
        %1031 = vmatpush.xpose.msra.mxu0 0.0
        %1032 = vmatpush.xpose.msra.mxu0 0.0
        %1033 = vmatpush.xpose.msra.mxu0 0.0
        %1034 = vmatpush.xpose.msra.mxu0 0.0
        %1035 = vmatpush.xpose.msra.mxu0 0.0
        %1036 = vmatpush.xpose.msra.mxu0 0.0
        %1037 = vmatpush.xpose.msra.mxu0 0.0
        %1038 = vmatpush.xpose.msra.mxu0 0.0
        %1039 = vmatpush.xpose.msra.mxu0 0.0
        %1040 = vmatpush.xpose.msra.mxu0 0.0
        %1041 = vmatpush.xpose.msra.mxu0 0.0
        %1042 = vmatpush.xpose.msra.mxu0 0.0
        %1043 = vmatpush.xpose.msra.mxu0 %v1026
        %1044 = vmatmul.f32.gmra.mxu0 %v1024
        %v1045 = vpop.f32.mrf.mxu0
        %v1046 = vadd.f32 %v997, %v1045
        %1047 = vdwg.mxu0
        %vm1048 = vcmask 64512
        %v1049 = vsel %vm1048, %v1022, -inf
        %1050 = vmax.xlane.f32.xlu0 %v1049
        %v1051 = vpop.xlane.xlu0 %1050
        %v1052 = vsel %vm1048, %v1046, -inf
        %1053 = vmax.xlane.f32.xlu0 %v1052
        %v1054 = vpop.xlane.xlu0 %1053
        %v1055 = vsub.f32 %v1022, %v1051
        %v1056 = vsub.f32 %v1046, %v1054
        %v1057 = vmul.f32 %v1055, 1.442695
        %v1058 = vpow.pop %v1057
        %v1059 = vmul.f32 %v1056, 1.442695
        %v1060 = vpow.pop %v1059
        %v1061 = vsel %vm1048, %v1058, 0.0
        %1062 = vadd.xlane.f32.xlu0 %v1061
        %v1063 = vpop.xlane.xlu0 %1062
        %v1064 = vsel %vm1048, %v1060, 0.0
        %1065 = vadd.xlane.f32.xlu0 %v1064
        %v1066 = vpop.xlane.xlu0 %1065
        %v1067 = vrcp.pop %v1063
        %v1068 = vrcp.pop %v1066
        %v1069 = vmul.f32 %v1058, %v1067
        %v1070 = vmul.f32 %v1060, %v1068
        %v1072 = vsel %vm1048, %v1069, 0
        %1074 = vmatpush.msra.mxu0 0.0
        %1075 = vmatpush.msra.mxu0 0.0
        %1076 = vmatpush.msra.mxu0 0.0
        %1077 = vmatpush.msra.mxu0 0.0
        %1078 = vmatpush.msra.mxu0 0.0
        %1079 = vmatpush.msra.mxu0 0.0
        %1080 = vmatpush.msra.mxu0 0.0
        %1081 = vmatpush.msra.mxu0 0.0
        %1082 = vmatpush.msra.mxu0 0.0
        %1083 = vmatpush.msra.mxu0 0.0
        %1084 = vmatpush.msra.mxu0 0.0
        %1085 = vmatpush.msra.mxu0 0.0
        %1086 = vmatpush.msra.mxu0 0.0
        %1087 = vmatpush.msra.mxu0 0.0
        %1088 = vmatpush.msra.mxu0 0.0
        %1089 = vmatpush.msra.mxu0 %v983
        %1090 = vmatmul.f32.gmra.mxu0 %v1072
        %v1091 = vpop.f32.mrf.mxu0
        %v1092 = vadd.f32 0.0, %v1091
        %1093 = vdwg.mxu0
        %v1095 = vsel %vm1048, %v1070, 0
        %1097 = vmatpush.msra.mxu0 0.0
        %1098 = vmatpush.msra.mxu0 0.0
        %1099 = vmatpush.msra.mxu0 0.0
        %1100 = vmatpush.msra.mxu0 0.0
        %1101 = vmatpush.msra.mxu0 0.0
        %1102 = vmatpush.msra.mxu0 0.0
        %1103 = vmatpush.msra.mxu0 0.0
        %1104 = vmatpush.msra.mxu0 0.0
        %1105 = vmatpush.msra.mxu0 0.0
        %1106 = vmatpush.msra.mxu0 0.0
        %1107 = vmatpush.msra.mxu0 0.0
        %1108 = vmatpush.msra.mxu0 0.0
        %1109 = vmatpush.msra.mxu0 0.0
        %1110 = vmatpush.msra.mxu0 0.0
        %1111 = vmatpush.msra.mxu0 0.0
        %1112 = vmatpush.msra.mxu0 %v994
        %1113 = vmatmul.f32.gmra.mxu0 %v1095
        %v1114 = vpop.f32.mrf.mxu0
        %v1115 = vadd.f32 0.0, %v1114
        %1116 = vdwg.mxu0
        %1118 = vrot.lane.b32.xlu0 %v1115, 64
        %v1119 = vpop.permute.xlu0 %1118
        %v1121 = vsel %vm999, %v1092, %v1119
        %v1122 = vld [vmem:[%s671] sm:$0xff]
        %v1123 = vld [vmem:[%s671 + $0x8] sm:$0xff]
        %v1124 = vld [vmem:[%s671 + $0x10] sm:$0xff]
        %v1125 = vld [vmem:[%s671 + $0x18] sm:$0xff]
        %v1126 = vld [vmem:[%s671 + $0x20] sm:$0xff]
        %v1127 = vld [vmem:[%s671 + $0x28] sm:$0xff]
        %v1128 = vld [vmem:[%s671 + $0x30] sm:$0xff]
        %v1129 = vld [vmem:[%s671 + $0x38] sm:$0xff]
        %v1130 = vld [vmem:[%s671 + $0x40] sm:$0xff]
        %v1131 = vld [vmem:[%s671 + $0x48] sm:$0xff]
        %v1132 = vld [vmem:[%s671 + $0x50] sm:$0xff]
        %v1133 = vld [vmem:[%s671 + $0x58] sm:$0xff]
        %v1134 = vld [vmem:[%s671 + $0x60] sm:$0xff]
        %v1135 = vld [vmem:[%s671 + $0x68] sm:$0xff]
        %v1136 = vld [vmem:[%s671 + $0x70] sm:$0xff]
        %v1137 = vld [vmem:[%s671 + $0x78] sm:$0xff]
        %v1138 = vld [vmem:[%s800] sm:$0x1]
        %v1140 = vperm.slane %v1138, 0
        %1142 = vmatpush.msra.mxu0 %v1137
        %1143 = vmatpush.msra.mxu0 %v1136
        %1144 = vmatpush.msra.mxu0 %v1135
        %1145 = vmatpush.msra.mxu0 %v1134
        %1146 = vmatpush.msra.mxu0 %v1133
        %1147 = vmatpush.msra.mxu0 %v1132
        %1148 = vmatpush.msra.mxu0 %v1131
        %1149 = vmatpush.msra.mxu0 %v1130
        %1150 = vmatpush.msra.mxu0 %v1129
        %1151 = vmatpush.msra.mxu0 %v1128
        %1152 = vmatpush.msra.mxu0 %v1127
        %1153 = vmatpush.msra.mxu0 %v1126
        %1154 = vmatpush.msra.mxu0 %v1125
        %1155 = vmatpush.msra.mxu0 %v1124
        %1156 = vmatpush.msra.mxu0 %v1123
        %1157 = vmatpush.msra.mxu0 %v1122
        %1158 = vmatmul.f32.gmra.mxu0 %v1121
        %v1159 = vpop.f32.mrf.mxu0
        %v1160 = vadd.f32 %v1140, %v1159
        %1161 = vdwg.mxu0
        %v1162 = vadd.f32 %v1160, %v865
        %v1163 = vld [vmem:[%s803] sm:$0x1]
        %v1164 = vld [vmem:[%s806] sm:$0x1]
        %1165 = vadd.xlane.f32.xlu0 %v1162
        %v1166 = vpop.xlane.xlu0 %1165
        %v1167 = vmul.f32 %v1166, 0.03125
        %v1168 = vsub.f32 %v1162, %v1167
        %v1169 = vsel %vm825, 1, 0
        %vm1170 = vcmp.eq.s32.totalorder %v1169, 1
        %v1171 = vsel %vm1170, %v1168, 0.0
        %v1172 = vmul.f32 %v1171, %v1171
        %1173 = vadd.xlane.f32.xlu0 %v1172
        %v1174 = vpop.xlane.xlu0 %1173
        %v1175 = vmul.f32 %v1174, 0.03125
        %v1176 = vadd.f32 %v1175, 1e-12
        %v1177 = vrsqrt.pop %v1176
        %v1178 = vmul.f32 %v1177, %v1176
        %v1179 = vmul.f32 %v1178, %v1177
        %v1180 = vmul.f32 0.5, %v1179
        %v1181 = vsub.f32 1.5, %v1180
        %v1182 = vmul.f32 %v1177, %v1181
        %vm1183 = vweird.f32 %v1176
        %vm1184 = vweird.f32 %v1177
        %vm1185 = vmor %vm1183, %vm1184
        %v1186 = vsel %vm1185, %v1177, %v1182
        %v1187 = vmul.f32 %v1171, %v1186
        %v1189 = vperm.slane %v1163, 0
        %v1191 = vmul.f32 %v1187, %v1189
        %v1193 = vperm.slane %v1164, 0
        %v1195 = vadd.f32 %v1191, %v1193
        %v1196 = vld [vmem:[%s681] sm:$0xff]
        %v1197 = vld [vmem:[%s681 + $0x8] sm:$0xff]
        %v1198 = vld [vmem:[%s681 + $0x10] sm:$0xff]
        %v1199 = vld [vmem:[%s681 + $0x18] sm:$0xff]
        %v1200 = vld [vmem:[%s681 + $0x20] sm:$0xff]
        %v1201 = vld [vmem:[%s681 + $0x28] sm:$0xff]
        %v1202 = vld [vmem:[%s681 + $0x30] sm:$0xff]
        %v1203 = vld [vmem:[%s681 + $0x38] sm:$0xff]
        %v1204 = vld [vmem:[%s681 + $0x40] sm:$0xff]
        %v1205 = vld [vmem:[%s681 + $0x48] sm:$0xff]
        %v1206 = vld [vmem:[%s681 + $0x50] sm:$0xff]
        %v1207 = vld [vmem:[%s681 + $0x58] sm:$0xff]
        %v1208 = vld [vmem:[%s681 + $0x60] sm:$0xff]
        %v1209 = vld [vmem:[%s681 + $0x68] sm:$0xff]
        %v1210 = vld [vmem:[%s681 + $0x70] sm:$0xff]
        %v1211 = vld [vmem:[%s681 + $0x78] sm:$0xff]
        %v1212 = vld [vmem:[%s809] sm:$0x1]
        %v1214 = vperm.slane %v1212, 0
        %1216 = vmatpush.msra.mxu0 %v1211
        %1217 = vmatpush.msra.mxu0 %v1210
        %1218 = vmatpush.msra.mxu0 %v1209
        %1219 = vmatpush.msra.mxu0 %v1208
        %1220 = vmatpush.msra.mxu0 %v1207
        %1221 = vmatpush.msra.mxu0 %v1206
        %1222 = vmatpush.msra.mxu0 %v1205
        %1223 = vmatpush.msra.mxu0 %v1204
        %1224 = vmatpush.msra.mxu0 %v1203
        %1225 = vmatpush.msra.mxu0 %v1202
        %1226 = vmatpush.msra.mxu0 %v1201
        %1227 = vmatpush.msra.mxu0 %v1200
        %1228 = vmatpush.msra.mxu0 %v1199
        %1229 = vmatpush.msra.mxu0 %v1198
        %1230 = vmatpush.msra.mxu0 %v1197
        %1231 = vmatpush.msra.mxu0 %v1196
        %1232 = vmatmul.f32.gmra.mxu0 %v1195
        %v1233 = vpop.f32.mrf.mxu0
        %v1234 = vadd.f32 %v1214, %v1233
        %1235 = vdwg.mxu0
        %v1236 = vmul.f32 %v1234, 0.5
        %v1237 = vmul.f32 %v1234, 0.044715
        %v1238 = vmul.f32 %v1237, %v1234
        %v1239 = vmul.f32 %v1238, %v1234
        %v1240 = vadd.f32 %v1234, %v1239
        %v1241 = vmul.f32 %v1240, 0.7978846
        %v1242 = vtanh.pop %v1241
        %v1243 = vadd.f32 %v1242, 1.0
        %v1244 = vmul.f32 %v1236, %v1243
        %v1245 = vld [vmem:[%s691] sm:$0xff]
        %v1246 = vld [vmem:[%s691 + $0x8] sm:$0xff]
        %v1247 = vld [vmem:[%s691 + $0x10] sm:$0xff]
        %v1248 = vld [vmem:[%s691 + $0x18] sm:$0xff]
        %v1249 = vld [vmem:[%s691 + $0x20] sm:$0xff]
        %v1250 = vld [vmem:[%s691 + $0x28] sm:$0xff]
        %v1251 = vld [vmem:[%s691 + $0x30] sm:$0xff]
        %v1252 = vld [vmem:[%s691 + $0x38] sm:$0xff]
        %v1253 = vld [vmem:[%s691 + $0x40] sm:$0xff]
        %v1254 = vld [vmem:[%s691 + $0x48] sm:$0xff]
        %v1255 = vld [vmem:[%s691 + $0x50] sm:$0xff]
        %v1256 = vld [vmem:[%s691 + $0x58] sm:$0xff]
        %v1257 = vld [vmem:[%s691 + $0x60] sm:$0xff]
        %v1258 = vld [vmem:[%s691 + $0x68] sm:$0xff]
        %v1259 = vld [vmem:[%s691 + $0x70] sm:$0xff]
        %v1260 = vld [vmem:[%s691 + $0x78] sm:$0xff]
        %v1261 = vld [vmem:[%s812] sm:$0x1]
        %v1263 = vperm.slane %v1261, 0
        %1265 = vmatpush.msra.mxu0 %v1260
        %1266 = vmatpush.msra.mxu0 %v1259
        %1267 = vmatpush.msra.mxu0 %v1258
        %1268 = vmatpush.msra.mxu0 %v1257
        %1269 = vmatpush.msra.mxu0 %v1256
        %1270 = vmatpush.msra.mxu0 %v1255
        %1271 = vmatpush.msra.mxu0 %v1254
        %1272 = vmatpush.msra.mxu0 %v1253
        %1273 = vmatpush.msra.mxu0 %v1252
        %1274 = vmatpush.msra.mxu0 %v1251
        %1275 = vmatpush.msra.mxu0 %v1250
        %1276 = vmatpush.msra.mxu0 %v1249
        %1277 = vmatpush.msra.mxu0 %v1248
        %1278 = vmatpush.msra.mxu0 %v1247
        %1279 = vmatpush.msra.mxu0 %v1246
        %1280 = vmatpush.msra.mxu0 %v1245
        %1281 = vmatmul.f32.gmra.mxu0 %v1244
        %v1282 = vpop.f32.mrf.mxu0
        %v1283 = vadd.f32 %v1263, %v1282
        %1284 = vdwg.mxu0
        %v1285 = vadd.f32 %v1283, %v1195
        %v1286 = vld [vmem:[%s815] sm:$0x1]
        %v1287 = vld [vmem:[%s818] sm:$0x1]
        %1288 = vadd.xlane.f32.xlu0 %v1285
        %v1289 = vpop.xlane.xlu0 %1288
        %v1290 = vmul.f32 %v1289, 0.03125
        %v1291 = vsub.f32 %v1285, %v1290
        %v1292 = vsel %vm1170, %v1291, 0.0
        %v1293 = vmul.f32 %v1292, %v1292
        %1294 = vadd.xlane.f32.xlu0 %v1293
        %v1295 = vpop.xlane.xlu0 %1294
        %v1296 = vmul.f32 %v1295, 0.03125
        %v1297 = vadd.f32 %v1296, 1e-12
        %v1298 = vrsqrt.pop %v1297
        %v1299 = vmul.f32 %v1298, %v1297
        %v1300 = vmul.f32 %v1299, %v1298
        %v1301 = vmul.f32 0.5, %v1300
        %v1302 = vsub.f32 1.5, %v1301
        %v1303 = vmul.f32 %v1298, %v1302
        %vm1304 = vweird.f32 %v1297
        %vm1305 = vweird.f32 %v1298
        %vm1306 = vmor %vm1304, %vm1305
        %v1307 = vsel %vm1306, %v1298, %v1303
        %v1308 = vmul.f32 %v1292, %v1307
        %v1310 = vperm.slane %v1286, 0
        %v1312 = vmul.f32 %v1308, %v1310
        %v1314 = vperm.slane %v1287, 0
        %v1316 = vadd.f32 %v1312, %v1314
        %1317 = vst [vmem:[#allocation2] sm:$0xff] %v1316
        %p1318 = scmp.eq.s32.totalorder %s41, 1
        // Predicated region
        $region105: #{_lambda_.1} parent=83 // pred_check
          %p1319 = pneg %p1318
        $region106: #{_lambda_.1} parent=83 // pred_check_branch
          %1321 = sbr.rel (%p1319) target = $region108
        $region107: #{_lambda_.1} parent=83 // pred_region
          %1322 = vst [vmem:[%s822] sm:$0xff] %v1316
        $region108: #{_lambda_.1} parent=83 // pred_fallthru
          _
        %p1323 = scmp.lt.s32.totalorder %s40, 1
        %s1324 = scalar_select %p1323, %s40, 1
        %s1325 = smul.addr %s1324, 8
        %s1326 = scalar_lea.vmem %s16, %s1325
        // Predicated region
        $region109: #{_lambda_.1} parent=83 // pred_check
          %p1327 = pneg %p472
        $region110: #{_lambda_.1} parent=83 // pred_check_branch
          %1329 = sbr.rel (%p1327) target = $region112
        $region111: #{_lambda_.1} parent=83 // pred_region
          _
        $region112: #{_lambda_.1} parent=83 // pred_fallthru
          _
      $region84: #{_lambda_.1} parent=5 // pred_fallthru
        _
      %p1330 = scmp.le.s32.totalorder 2, %s31
      // Predicated region
      $region113: #{_lambda_.1} parent=5 // pred_check
        %p1331 = pneg %p1330
      $region114: #{_lambda_.1} parent=5 // pred_check_branch
        %1333 = sbr.rel (%p1331) target = $region116
      $region115: #{_lambda_.1} parent=5 // pred_region
        %s1334 = ssub.s32 %s31, 2
        // Predicated region
        $region117: #{_lambda_.1} parent=115 // pred_check
          %p1335 = pneg %p478
        $region118: #{_lambda_.1} parent=115 // pred_check_branch
          %1337 = sbr.rel (%p1335) target = $region120
        $region119: #{_lambda_.1} parent=115 // pred_region
          %p1338 = scmp.lt.s32.totalorder %s42, 1
          %s1339 = scalar_select %p1338, %s42, 1
          %s1340 = smul.addr %s1339, 8
          %s1341 = scalar_lea.vmem %s16, %s1340
        $region120: #{_lambda_.1} parent=115 // pred_fallthru
          _
      $region116: #{_lambda_.1} parent=5 // pred_fallthru
        _
    $region6: #{_lambda_.1} parent=1 // loop_footer
      %s35 = sadd.s32 1, %s31
    $region7: #{_lambda_.1} parent=1 // loop_footer_branch
      %30 = sbr.rel target = $region3
    $region8: #{_lambda_.1} parent=1 // loop_exit
      _
    %1342 = vsyncpa [#allocation4], 1
    %s1343 = scalar_lea.sflag [#allocation4], 1
    %1344 = vsyncpa %s1343, 1
    %1345 = vsyncpa [#allocation6], 1
    %s1346 = scalar_lea.sflag [#allocation6], 1
    %1347 = vsyncpa %s1346, 1
    %1348 = vsyncpa [#allocation9], 1
    %s1349 = scalar_lea.sflag [#allocation9], 1
    %1350 = vsyncpa %s1349, 1

</llo_original>
